<compile_context>
chip_gen: v7x
topology: tpu7x:2x2x1
jax: 0.10.0
libtpu: 0.0.40
codegen_flags: <defaults>
</compile_context>

<pallas_src>
import functools

import jax
import jax.numpy as jnp
from jax.experimental import pallas as pl
from jax.experimental.pallas import tpu as pltpu

BN_EPS = 1e-5


def _round_up(x, m):
    return (x + m - 1) // m * m


def _pick_batch_tile(batch, n_cols, target_cols=2048):
    """Images per grid step: prefer >= 2 grid steps (v7x megacore), then the
    largest tile that keeps the per-step matmul N under ~target_cols."""
    divisors = [b for b in range(1, batch + 1) if batch % b == 0]
    fits = [b for b in divisors if b * n_cols <= target_cols] or [1]
    two_steps = [b for b in fits if batch // b >= 2]
    return max(two_steps) if two_steps else max(fits)


def _vmem_limit_bytes():
    cap = 64 << 20                       # conservative fallback (v7x physical)
    try:
        cap = int(getattr(pltpu.get_tpu_info(), "vmem_capacity_bytes", cap))
    except Exception:
        pass
    return int(min(cap * 3 // 4, 96 << 20))   # ~48 MiB v7x, ~96 MiB v5e/v6e


def _gcu_conv_gate_kernel(x_ref, w_ref, g_ref, stats_ref, *, H, W):
    """Fused conv3x3 + gate-conv3x3 + gating for one batch tile, plus the
    BatchNorm partial sums for that tile.

    x_ref     : (Bb, Cin_p, NWpad)     flattened zero-padded images (bf16)
    w_ref     : (9, 2*Cout_p, Cin_p)   per-tap [conv ; gate] weights (bf16)
    g_ref     : (Bb, Cout_p, H*(W+2))  gated activations over widened columns
    stats_ref : (1, Cout_p, 2)         [sum, sum_of_squares] over valid pixels
    """
    Wp = W + 2
    ncomp = H * Wp                        # widened N: 2 junk columns per row
    bb = x_ref.shape[0]
    cout2 = w_ref.shape[1]
    cout_p = cout2 // 2

    # 0/1 mask over the widened columns: junk where (col % Wp) >= W.
    col = jax.lax.broadcasted_iota(jnp.int32, (1, ncomp), 1)
    valid = ((col % Wp) < W).astype(jnp.float32)

    s_tot = jnp.zeros((cout_p, 1), jnp.float32)
    q_tot = jnp.zeros((cout_p, 1), jnp.float32)

    for b in range(bb):
        xb = x_ref[b]                     # (Cin_p, NWpad), bf16
        acc = None
        for dy in range(3):
            for dx in range(3):
                off = dy * Wp + dx
                # Contiguous static slice: tap (dy, dx) for all output pixels.
                tap = xb[:, off:off + ncomp]
                # One MXU matmul per tap (K = Cin_p), f32 accumulation.
                # TODO(synk): for small Cin, fold the 3 dx taps per dy into one
                # K = 3*Cin_p matmul to fill the MXU contraction depth.
                part = jnp.dot(w_ref[dy * 3 + dx], tap,
                               preferred_element_type=jnp.float32)
                acc = part if acc is None else acc + part

        conv = acc[:cout_p, :]            # sublane-aligned (Cout_p % 8 == 0)
        gate = acc[cout_p:, :]
        gated = conv * jax.nn.sigmoid(gate)       # f32 on VPU/EUP

        g_ref[b] = gated.astype(g_ref.dtype)      # bf16 store (HBM traffic /2)

        gm = gated * valid                # junk columns excluded from BN stats
        s_tot = s_tot + jnp.sum(gm, axis=1, keepdims=True)
        q_tot = q_tot + jnp.sum(gm * gated, axis=1, keepdims=True)

    stats_ref[0] = jnp.concatenate([s_tot, q_tot], axis=1)


def gcu_forward(x_nchw, w1_oihw, w2_oihw, gamma, beta, *,
                compute_dtype=jnp.bfloat16):
    """x_nchw: (B, Cin, H, W) -> (B, Cout, H, W). Matches GCU.forward (training BN)."""
    B, Cin, H, W = x_nchw.shape
    Cout = w1_oihw.shape[0]
    Hp, Wp = H + 2, W + 2
    ncomp = H * Wp
    Cin_p = _round_up(Cin, 8)
    Cout_p = _round_up(Cout, 8)
    # Flat padded length: tap offsets reach Hp*Wp + 1; round up to a lane multiple.
    nw_pad = _round_up(Hp * Wp + 2, 128)

    # --- input prep: spatial zero pad (padding=1), channel pad, flatten, bf16 -
    x_pad = jnp.pad(x_nchw, ((0, 0), (0, Cin_p - Cin), (1, 1), (1, 1)))
    x_flat = x_pad.reshape(B, Cin_p, Hp * Wp)          # free row-major reshape
    x_flat = jnp.pad(x_flat, ((0, 0), (0, 0), (0, nw_pad - Hp * Wp)))
    x_flat = x_flat.astype(compute_dtype)

    # --- weight prep: OIHW -> (9, 2*Cout_p, Cin_p), conv || gate per tap ------
    def prep(w):
        w = jnp.pad(w, ((0, Cout_p - Cout), (0, Cin_p - Cin), (0, 0), (0, 0)))
        return jnp.transpose(w, (2, 3, 0, 1))          # (3, 3, Cout_p, Cin_p)

    w_all = jnp.concatenate([prep(w1_oihw), prep(w2_oihw)], axis=2)
    w_all = w_all.reshape(9, 2 * Cout_p, Cin_p).astype(compute_dtype)

    bb = _pick_batch_tile(B, ncomp)
    nb = B // bb

    cparams = pltpu.CompilerParams(
        dimension_semantics=("parallel",),     # batch tiles shard across TCs
        vmem_limit_bytes=_vmem_limit_bytes(),
    )

    kernel = functools.partial(_gcu_conv_gate_kernel, H=H, W=W)

    gated, stats = pl.pallas_call(
        kernel,
        grid=(nb,),
        in_specs=[
            pl.BlockSpec((bb, Cin_p, nw_pad), lambda b: (b, 0, 0)),
            # Constant index map -> weights stay resident across grid steps.
            # TODO(synk): pipeline_mode=pl.Buffered(1) would drop the unused
            # second weight buffer; omitted for lowering robustness.
            pl.BlockSpec((9, 2 * Cout_p, Cin_p), lambda b: (0, 0, 0)),
        ],
        out_specs=(
            pl.BlockSpec((bb, Cout_p, ncomp), lambda b: (b, 0, 0)),
            pl.BlockSpec((1, Cout_p, 2), lambda b: (b, 0, 0)),
        ),
        out_shape=(
            jax.ShapeDtypeStruct((B, Cout_p, ncomp), compute_dtype),
            jax.ShapeDtypeStruct((nb, Cout_p, 2), jnp.float32),
        ),
        compiler_params=cparams,
    )(x_flat, w_all)

    # --- tiny O(Cout) BN finalize + fused apply in plain JAX ------------------
    # One-pass E[x^2]-E[x]^2 in f32 (matches training-mode BatchNorm2d; accepted
    # precision tradeoff vs a centered two-pass computation).
    n = B * H * W
    sums = jnp.sum(stats[:, :Cout, 0], axis=0)
    ssqs = jnp.sum(stats[:, :Cout, 1], axis=0)
    mean = sums / n
    var = jnp.maximum(ssqs / n - mean * mean, 0.0)
    inv_std = jax.lax.rsqrt(var + BN_EPS)
    scale = gamma.astype(jnp.float32) * inv_std
    bias = beta.astype(jnp.float32) - mean * scale

    # Drop pad channels + the 2 junk columns per row, upcast, apply folded
    # scale/bias: XLA fuses all of this into a single pass over the data.
    g = gated.reshape(B, Cout_p, H, Wp)[:, :Cout, :, :W].astype(jnp.float32)
    return g * scale.reshape(1, Cout, 1, 1) + bias.reshape(1, Cout, 1, 1)


def reference_gcu(x_nchw, w1_oihw, w2_oihw, gamma, beta):
    """Pure-JAX f32 reference (matches PyTorch GCU.forward in training mode)."""
    dn = jax.lax.conv_dimension_numbers(x_nchw.shape, w1_oihw.shape,
                                        ("NCHW", "OIHW", "NCHW"))
    conv = jax.lax.conv_general_dilated(x_nchw, w1_oihw, (1, 1), ((1, 1), (1, 1)),
                                        dimension_numbers=dn)
    gate = jax.lax.conv_general_dilated(x_nchw, w2_oihw, (1, 1), ((1, 1), (1, 1)),
                                        dimension_numbers=dn)
    g = conv * jax.nn.sigmoid(gate)
    mean = jnp.mean(g, axis=(0, 2, 3), keepdims=True)
    var = jnp.mean((g - mean) ** 2, axis=(0, 2, 3), keepdims=True)
    gam = gamma.reshape(1, -1, 1, 1)
    bet = beta.reshape(1, -1, 1, 1)
    return (g - mean) / jnp.sqrt(var + BN_EPS) * gam + bet


if __name__ == "__main__":
    key = jax.random.PRNGKey(0)
    B, Cin, Cout, H, W = 2, 4, 8, 16, 16

    k_x, k_w1, k_w2, k_g, k_b = jax.random.split(key, 5)
    x = jax.random.normal(k_x, (B, Cin, H, W), jnp.float32)

    # Deterministic conv weights (PyTorch OIHW layout), bias=False.
    fan_in = Cin * 3 * 3
    bound = 1.0 / float(fan_in) ** 0.5
    w1 = jax.random.uniform(k_w1, (Cout, Cin, 3, 3), jnp.float32, -bound, bound)
    w2 = jax.random.uniform(k_w2, (Cout, Cin, 3, 3), jnp.float32, -bound, bound)

    # Non-trivial BatchNorm2d affine params to exercise the folded scale/bias.
    gamma = jax.random.uniform(k_g, (Cout,), jnp.float32, 0.5, 1.5)
    beta = jax.random.normal(k_b, (Cout,), jnp.float32) * 0.1

    out = jax.jit(gcu_forward)(x, w1, w2, gamma, beta)
    out = jax.block_until_ready(out)

    ref = reference_gcu(x, w1, w2, gamma, beta)
    assert out.shape == (B, Cout, H, W)
    max_err = float(jnp.max(jnp.abs(out - ref)))
    mean_err = float(jnp.mean(jnp.abs(out - ref)))
    # bf16 MXU inputs + bf16-stored gated intermediate => looser-than-f32 tolerance.
    assert max_err < 1e-1, f"max abs err {max_err}"
    assert mean_err < 2e-2, f"mean abs err {mean_err}"
    print("KERNEL_OK")
</pallas_src>

<mosaic_0001>
module attributes {stable_mosaic.version = 11 : i64} {
  func.func @_gcu_conv_gate_kernel(%arg0: i32, %arg1: memref<1x8x384xbf16, #tpu.memory_space<vmem>>, %arg2: memref<9x16x8xbf16, #tpu.memory_space<vmem>>, %arg3: memref<1x8x288xbf16, #tpu.memory_space<vmem>>, %arg4: memref<1x8x2xf32, #tpu.memory_space<vmem>>) attributes {dimension_semantics = [#tpu.dimension_semantics<parallel>], iteration_bounds = array<i64: 2>, scalar_prefetch = 0 : i64, scratch_operands = 0 : i64, tpu.core_type = #tpu.core_type<tc>, window_params = [{transform_indices = @transform_0, window_bounds = array<i64: 1, 8, 384>}, {pipeline_mode = #tpu.pipeline_mode<synchronous>, transform_indices = @transform_1, window_bounds = array<i64: 9, 16, 8>}, {transform_indices = @transform_2, window_bounds = array<i64: 1, 8, 288>}, {transform_indices = @transform_3, window_bounds = array<i64: 1, 8, 2>}]} {
    %0 = tpu.iota {dimensions = array<i32: 1>} : vector<1x288xi32>
    %c18_i32 = arith.constant 18 : i32
    %c0_i32 = arith.constant 0 : i32
    %1 = arith.cmpi eq, %c18_i32, %c0_i32 : i32
    %c1_i32 = arith.constant 1 : i32
    %2 = arith.select %1, %c1_i32, %c18_i32 : i32
    %3 = vector.broadcast %2 : i32 to vector<1x288xi32>
    %4 = arith.remsi %0, %3 : vector<1x288xi32>
    %c0_i32_0 = arith.constant 0 : i32
    %5 = vector.broadcast %c0_i32_0 : i32 to vector<1x288xi32>
    %6 = arith.cmpi ne, %4, %5 : vector<1x288xi32>
    %c0_i32_1 = arith.constant 0 : i32
    %7 = vector.broadcast %c0_i32_1 : i32 to vector<1x288xi32>
    %8 = arith.cmpi slt, %4, %7 : vector<1x288xi32>
    %c0_i32_2 = arith.constant 0 : i32
    %9 = arith.cmpi slt, %2, %c0_i32_2 : i32
    %10 = vector.broadcast %9 : i1 to vector<1x288xi1>
    %11 = vector.broadcast %10 : vector<1x288xi1> to vector<1x288xi1>
    %12 = arith.xori %8, %11 : vector<1x288xi1>
    %13 = arith.andi %12, %6 : vector<1x288xi1>
    %14 = vector.broadcast %2 : i32 to vector<1x288xi32>
    %15 = arith.addi %4, %14 : vector<1x288xi32>
    %16 = arith.select %13, %15, %4 : vector<1x288xi1>, vector<1x288xi32>
    %c16_i32 = arith.constant 16 : i32
    %17 = vector.broadcast %c16_i32 : i32 to vector<1x288xi32>
    %18 = arith.cmpi slt, %16, %17 : vector<1x288xi32>
    %19 = arith.extui %18 : vector<1x288xi1> to vector<1x288xi32>
    %20 = arith.sitofp %19 : vector<1x288xi32> to vector<1x288xf32>
    %cst = arith.constant 0.000000e+00 : f32
    %21 = vector.broadcast %cst : f32 to vector<8x1xf32>
    %cst_3 = arith.constant 0.000000e+00 : f32
    %22 = vector.broadcast %cst_3 : f32 to vector<8x1xf32>
    %c0 = arith.constant 0 : index
    %c0_4 = arith.constant 0 : index
    %c0_5 = arith.constant 0 : index
    %23 = vector.load %arg1[%c0, %c0_4, %c0_5] : memref<1x8x384xbf16, #tpu.memory_space<vmem>>, vector<1x8x384xbf16>
    %24 = vector.shape_cast %23 : vector<1x8x384xbf16> to vector<8x384xbf16>
    %25 = vector.extract_strided_slice %24 {offsets = [0, 0], sizes = [8, 288], strides = [1, 1]} : vector<8x384xbf16> to vector<8x288xbf16>
    %c0_6 = arith.constant 0 : index
    %c0_7 = arith.constant 0 : index
    %c0_8 = arith.constant 0 : index
    %26 = vector.load %arg2[%c0_6, %c0_7, %c0_8] : memref<9x16x8xbf16, #tpu.memory_space<vmem>>, vector<1x16x8xbf16>
    %27 = vector.shape_cast %26 : vector<1x16x8xbf16> to vector<16x8xbf16>
    %cst_9 = arith.constant dense<0.000000e+00> : vector<16x288xf32>
    %28 = tpu.matmul %27, %25, %cst_9 {dimension_numbers = #tpu.dot_dimension_numbers<[1], [0], [0], [1], [0, 0, 1, 1], [], []>} : vector<16x8xbf16>, vector<8x288xbf16>, vector<16x288xf32> -> vector<16x288xf32>
    %29 = vector.extract_strided_slice %24 {offsets = [0, 1], sizes = [8, 288], strides = [1, 1]} : vector<8x384xbf16> to vector<8x288xbf16>
    %c1 = arith.constant 1 : index
    %c0_10 = arith.constant 0 : index
    %c0_11 = arith.constant 0 : index
    %30 = vector.load %arg2[%c1, %c0_10, %c0_11] : memref<9x16x8xbf16, #tpu.memory_space<vmem>>, vector<1x16x8xbf16>
    %31 = vector.shape_cast %30 : vector<1x16x8xbf16> to vector<16x8xbf16>
    %cst_12 = arith.constant dense<0.000000e+00> : vector<16x288xf32>
    %32 = tpu.matmul %31, %29, %cst_12 {dimension_numbers = #tpu.dot_dimension_numbers<[1], [0], [0], [1], [0, 0, 1, 1], [], []>} : vector<16x8xbf16>, vector<8x288xbf16>, vector<16x288xf32> -> vector<16x288xf32>
    %33 = arith.addf %28, %32 : vector<16x288xf32>
    %34 = vector.extract_strided_slice %24 {offsets = [0, 2], sizes = [8, 288], strides = [1, 1]} : vector<8x384xbf16> to vector<8x288xbf16>
    %c2 = arith.constant 2 : index
    %c0_13 = arith.constant 0 : index
    %c0_14 = arith.constant 0 : index
    %35 = vector.load %arg2[%c2, %c0_13, %c0_14] : memref<9x16x8xbf16, #tpu.memory_space<vmem>>, vector<1x16x8xbf16>
    %36 = vector.shape_cast %35 : vector<1x16x8xbf16> to vector<16x8xbf16>
    %cst_15 = arith.constant dense<0.000000e+00> : vector<16x288xf32>
    %37 = tpu.matmul %36, %34, %cst_15 {dimension_numbers = #tpu.dot_dimension_numbers<[1], [0], [0], [1], [0, 0, 1, 1], [], []>} : vector<16x8xbf16>, vector<8x288xbf16>, vector<16x288xf32> -> vector<16x288xf32>
    %38 = arith.addf %33, %37 : vector<16x288xf32>
    %39 = vector.extract_strided_slice %24 {offsets = [0, 18], sizes = [8, 288], strides = [1, 1]} : vector<8x384xbf16> to vector<8x288xbf16>
    %c3 = arith.constant 3 : index
    %c0_16 = arith.constant 0 : index
    %c0_17 = arith.constant 0 : index
    %40 = vector.load %arg2[%c3, %c0_16, %c0_17] : memref<9x16x8xbf16, #tpu.memory_space<vmem>>, vector<1x16x8xbf16>
    %41 = vector.shape_cast %40 : vector<1x16x8xbf16> to vector<16x8xbf16>
    %cst_18 = arith.constant dense<0.000000e+00> : vector<16x288xf32>
    %42 = tpu.matmul %41, %39, %cst_18 {dimension_numbers = #tpu.dot_dimension_numbers<[1], [0], [0], [1], [0, 0, 1, 1], [], []>} : vector<16x8xbf16>, vector<8x288xbf16>, vector<16x288xf32> -> vector<16x288xf32>
    %43 = arith.addf %38, %42 : vector<16x288xf32>
    %44 = vector.extract_strided_slice %24 {offsets = [0, 19], sizes = [8, 288], strides = [1, 1]} : vector<8x384xbf16> to vector<8x288xbf16>
    %c4 = arith.constant 4 : index
    %c0_19 = arith.constant 0 : index
    %c0_20 = arith.constant 0 : index
    %45 = vector.load %arg2[%c4, %c0_19, %c0_20] : memref<9x16x8xbf16, #tpu.memory_space<vmem>>, vector<1x16x8xbf16>
    %46 = vector.shape_cast %45 : vector<1x16x8xbf16> to vector<16x8xbf16>
    %cst_21 = arith.constant dense<0.000000e+00> : vector<16x288xf32>
    %47 = tpu.matmul %46, %44, %cst_21 {dimension_numbers = #tpu.dot_dimension_numbers<[1], [0], [0], [1], [0, 0, 1, 1], [], []>} : vector<16x8xbf16>, vector<8x288xbf16>, vector<16x288xf32> -> vector<16x288xf32>
    %48 = arith.addf %43, %47 : vector<16x288xf32>
    %49 = vector.extract_strided_slice %24 {offsets = [0, 20], sizes = [8, 288], strides = [1, 1]} : vector<8x384xbf16> to vector<8x288xbf16>
    %c5 = arith.constant 5 : index
    %c0_22 = arith.constant 0 : index
    %c0_23 = arith.constant 0 : index
    %50 = vector.load %arg2[%c5, %c0_22, %c0_23] : memref<9x16x8xbf16, #tpu.memory_space<vmem>>, vector<1x16x8xbf16>
    %51 = vector.shape_cast %50 : vector<1x16x8xbf16> to vector<16x8xbf16>
    %cst_24 = arith.constant dense<0.000000e+00> : vector<16x288xf32>
    %52 = tpu.matmul %51, %49, %cst_24 {dimension_numbers = #tpu.dot_dimension_numbers<[1], [0], [0], [1], [0, 0, 1, 1], [], []>} : vector<16x8xbf16>, vector<8x288xbf16>, vector<16x288xf32> -> vector<16x288xf32>
    %53 = arith.addf %48, %52 : vector<16x288xf32>
    %54 = vector.extract_strided_slice %24 {offsets = [0, 36], sizes = [8, 288], strides = [1, 1]} : vector<8x384xbf16> to vector<8x288xbf16>
    %c6 = arith.constant 6 : index
    %c0_25 = arith.constant 0 : index
    %c0_26 = arith.constant 0 : index
    %55 = vector.load %arg2[%c6, %c0_25, %c0_26] : memref<9x16x8xbf16, #tpu.memory_space<vmem>>, vector<1x16x8xbf16>
    %56 = vector.shape_cast %55 : vector<1x16x8xbf16> to vector<16x8xbf16>
    %cst_27 = arith.constant dense<0.000000e+00> : vector<16x288xf32>
    %57 = tpu.matmul %56, %54, %cst_27 {dimension_numbers = #tpu.dot_dimension_numbers<[1], [0], [0], [1], [0, 0, 1, 1], [], []>} : vector<16x8xbf16>, vector<8x288xbf16>, vector<16x288xf32> -> vector<16x288xf32>
    %58 = arith.addf %53, %57 : vector<16x288xf32>
    %59 = vector.extract_strided_slice %24 {offsets = [0, 37], sizes = [8, 288], strides = [1, 1]} : vector<8x384xbf16> to vector<8x288xbf16>
    %c7 = arith.constant 7 : index
    %c0_28 = arith.constant 0 : index
    %c0_29 = arith.constant 0 : index
    %60 = vector.load %arg2[%c7, %c0_28, %c0_29] : memref<9x16x8xbf16, #tpu.memory_space<vmem>>, vector<1x16x8xbf16>
    %61 = vector.shape_cast %60 : vector<1x16x8xbf16> to vector<16x8xbf16>
    %cst_30 = arith.constant dense<0.000000e+00> : vector<16x288xf32>
    %62 = tpu.matmul %61, %59, %cst_30 {dimension_numbers = #tpu.dot_dimension_numbers<[1], [0], [0], [1], [0, 0, 1, 1], [], []>} : vector<16x8xbf16>, vector<8x288xbf16>, vector<16x288xf32> -> vector<16x288xf32>
    %63 = arith.addf %58, %62 : vector<16x288xf32>
    %64 = vector.extract_strided_slice %24 {offsets = [0, 38], sizes = [8, 288], strides = [1, 1]} : vector<8x384xbf16> to vector<8x288xbf16>
    %c8 = arith.constant 8 : index
    %c0_31 = arith.constant 0 : index
    %c0_32 = arith.constant 0 : index
    %65 = vector.load %arg2[%c8, %c0_31, %c0_32] : memref<9x16x8xbf16, #tpu.memory_space<vmem>>, vector<1x16x8xbf16>
    %66 = vector.shape_cast %65 : vector<1x16x8xbf16> to vector<16x8xbf16>
    %cst_33 = arith.constant dense<0.000000e+00> : vector<16x288xf32>
    %67 = tpu.matmul %66, %64, %cst_33 {dimension_numbers = #tpu.dot_dimension_numbers<[1], [0], [0], [1], [0, 0, 1, 1], [], []>} : vector<16x8xbf16>, vector<8x288xbf16>, vector<16x288xf32> -> vector<16x288xf32>
    %68 = arith.addf %63, %67 : vector<16x288xf32>
    %69 = vector.extract_strided_slice %68 {offsets = [0, 0], sizes = [8, 288], strides = [1, 1]} : vector<16x288xf32> to vector<8x288xf32>
    %70 = vector.extract_strided_slice %68 {offsets = [8, 0], sizes = [8, 288], strides = [1, 1]} : vector<16x288xf32> to vector<8x288xf32>
    %71 = arith.negf %70 : vector<8x288xf32>
    %72 = math.exp %71 : vector<8x288xf32>
    %cst_34 = arith.constant 1.000000e+00 : f32
    %73 = vector.broadcast %cst_34 : f32 to vector<8x288xf32>
    %74 = arith.addf %73, %72 : vector<8x288xf32>
    %75 = arith.divf %73, %74 : vector<8x288xf32>
    %76 = arith.mulf %69, %75 : vector<8x288xf32>
    %77 = arith.truncf %76 : vector<8x288xf32> to vector<8x288xbf16>
    %c0_35 = arith.constant 0 : index
    %c0_36 = arith.constant 0 : index
    %c0_37 = arith.constant 0 : index
    %78 = vector.load %arg3[%c0_35, %c0_36, %c0_37] : memref<1x8x288xbf16, #tpu.memory_space<vmem>>, vector<1x8x288xbf16>
    %79 = vector.shape_cast %78 : vector<1x8x288xbf16> to vector<8x288xbf16>
    %80 = vector.shape_cast %77 : vector<8x288xbf16> to vector<1x8x288xbf16>
    tpu.vector_store %arg3[%c0_35, %c0_36, %c0_37], %80 {strides = array<i32>} : memref<1x8x288xbf16, #tpu.memory_space<vmem>>, vector<1x8x288xbf16>,
    %81 = vector.broadcast %20 : vector<1x288xf32> to vector<8x288xf32>
    %82 = arith.mulf %76, %81 : vector<8x288xf32>
    %cst_38 = arith.constant dense<0.000000e+00> : vector<8xf32>
    %83 = vector.multi_reduction <add>, %82, %cst_38 [1] : vector<8x288xf32> to vector<8xf32>
    %84 = vector.shape_cast %83 : vector<8xf32> to vector<8x1xf32>
    %85 = arith.addf %21, %84 : vector<8x1xf32>
    %86 = arith.mulf %82, %76 : vector<8x288xf32>
    %cst_39 = arith.constant dense<0.000000e+00> : vector<8xf32>
    %87 = vector.multi_reduction <add>, %86, %cst_39 [1] : vector<8x288xf32> to vector<8xf32>
    %88 = vector.shape_cast %87 : vector<8xf32> to vector<8x1xf32>
    %89 = arith.addf %22, %88 : vector<8x1xf32>
    %90 = tpu.concatenate %85, %89 in 1 : vector<8x1xf32>, vector<8x1xf32> -> vector<8x2xf32>
    %c0_40 = arith.constant 0 : index
    %c0_41 = arith.constant 0 : index
    %c0_42 = arith.constant 0 : index
    %91 = vector.load %arg4[%c0_40, %c0_41, %c0_42] : memref<1x8x2xf32, #tpu.memory_space<vmem>>, vector<1x8x2xf32>
    %92 = vector.shape_cast %91 : vector<1x8x2xf32> to vector<8x2xf32>
    %93 = vector.shape_cast %90 : vector<8x2xf32> to vector<1x8x2xf32>
    tpu.vector_store %arg4[%c0_40, %c0_41, %c0_42], %93 {strides = array<i32>} : memref<1x8x2xf32, #tpu.memory_space<vmem>>, vector<1x8x2xf32>,
    return
  }
  func.func @transform_0(%arg0: i32) -> (i32, i32, i32) {
    %c0_i32 = arith.constant 0 : i32
    %c0_i32_0 = arith.constant 0 : i32
    %c0_i32_1 = arith.constant 0 : i32
    return %arg0, %c0_i32, %c0_i32_0 : i32, i32, i32
  }
  func.func @transform_1(%arg0: i32) -> (i32, i32, i32) {
    %c0_i32 = arith.constant 0 : i32
    %c0_i32_0 = arith.constant 0 : i32
    %c0_i32_1 = arith.constant 0 : i32
    %c0_i32_2 = arith.constant 0 : i32
    return %c0_i32, %c0_i32_0, %c0_i32_1 : i32, i32, i32
  }
  func.func @transform_2(%arg0: i32) -> (i32, i32, i32) {
    %c0_i32 = arith.constant 0 : i32
    %c0_i32_0 = arith.constant 0 : i32
    %c0_i32_1 = arith.constant 0 : i32
    return %arg0, %c0_i32, %c0_i32_0 : i32, i32, i32
  }
  func.func @transform_3(%arg0: i32) -> (i32, i32, i32) {
    %c0_i32 = arith.constant 0 : i32
    %c0_i32_0 = arith.constant 0 : i32
    %c0_i32_1 = arith.constant 0 : i32
    return %arg0, %c0_i32, %c0_i32_0 : i32, i32, i32
  }
}

</mosaic_0001>

<llo_original>
// kernel: gcu_forward.1
$region0: #{gcu_forward.1}
  #allocation0 [shape = 'u32[]', space=smem, size = 0x4, offset = 0x4, fixed_abs, tag = 'smem constant byte address 0x4 - core index']
  #allocation1 [shape = 'u32[144,128]{1,0:T(1,128)}', space=vmem, size = 0x12000, scoped, tag = 'internal scratch']
  %s0 = inlined_call_operand.vmem [shape: bf16[2,8,384], index: 0, kind: input, shape index: {}]
  %s1 = inlined_call_operand.vmem [shape: bf16[9,16,8], index: 1, kind: input, shape index: {}]
  %s2 = inlined_call_operand.vmem [shape: bf16[2,8,288], index: 2, kind: output, shape index: {0}]
  %s3 = inlined_call_operand.vmem [shape: f32[2,8,2], index: 3, kind: output, shape index: {1}]
  %4 = xla_tuple %s2, %s3
  %s5 = sld [smem:[#allocation0]]
  $region49: #{gcu_forward.1} parent=0
    _
  %s7 = ssub.s32 1, %s5
  %s8 = scalar_select 0, %s7, %s5
  loop: start=0, step=1, limit=4
  $region2: #{gcu_forward.1} parent=0 // loop_pre_header
    _
  $region3: #{gcu_forward.1} parent=0 // loop_header
    %s10 = sphi 0, %s14
    %p11 = scmp.ge.s32.totalorder %s10, 4
    %s20 = sphi 0, %s22
    %s23 = sphi 0, %s20
    %s24 = sphi 0, %s23
    %s40 = sphi 0, %s24
    %s44 = sphi 0, %s44
    %s46 = sphi 0, %s44
    %s47 = sphi 0, %s46
    %s61 = sphi 0, %s47
    %s67 = sphi 0, %s69
    %s70 = sphi 0, %s67
    %s71 = sphi 0, %s70
    %s87 = sphi 0, %s71
    %s93 = sphi 0, %s95
    %s96 = sphi 0, %s93
    %s97 = sphi 0, %s96
    %s113 = sphi 0, %s97
  $region4: #{gcu_forward.1} parent=0 // loop_header_branch
    %13 = sbr.rel (%p11) target = $region8
  $region5: #{gcu_forward.1} parent=0 // loop_body
    %s15 = ssub.s32 %s10, 1
    %s16 = ssub.s32 %s10, 2
    %s17 = sadd.s32 %s10, 1
    %s18 = ssub.s32 %s10, %s17
    %p19 = scmp.eq.s32.totalorder %s18, 0
    %s21 = sadd.s32 %s20, 1
    %s22 = scalar_select %p19, %s20, %s21
    %p25 = pneg %p19
    %p26 = scmp.eq.s32.totalorder %s10, 1
    %p27 = por %p25, %p26
    %p28 = scmp.ne.s32.totalorder %s20, %s23
    %p29 = scmp.eq.s32.totalorder %s10, 0
    %p30 = por %p28, %p29
    %p31 = scmp.ne.s32.totalorder %s20, %s23
    %p32 = scmp.eq.s32.totalorder %s15, 1
    %p33 = por %p31, %p32
    %p34 = scmp.ne.s32.totalorder %s23, %s24
    %p35 = scmp.eq.s32.totalorder %s15, 0
    %p36 = por %p34, %p35
    %p37 = scmp.ne.s32.totalorder %s23, %s24
    %p38 = scmp.eq.s32.totalorder %s16, 1
    %p39 = por %p37, %p38
    %p41 = scmp.ne.s32.totalorder %s24, %s40
    %p42 = scmp.eq.s32.totalorder %s16, 0
    %p43 = por %p41, %p42
    %s45 = sadd.s32 %s44, 1
    %p48 = scmp.eq.s32.totalorder %s10, 1
    %p49 = scmp.ne.s32.totalorder %s44, %s46
    %p50 = scmp.eq.s32.totalorder %s10, 0
    %p51 = por %p49, %p50
    %p52 = scmp.ne.s32.totalorder %s44, %s46
    %p53 = scmp.eq.s32.totalorder %s15, 1
    %p54 = por %p52, %p53
    %p55 = scmp.ne.s32.totalorder %s46, %s47
    %p56 = scmp.eq.s32.totalorder %s15, 0
    %p57 = por %p55, %p56
    %p58 = scmp.ne.s32.totalorder %s46, %s47
    %p59 = scmp.eq.s32.totalorder %s16, 1
    %p60 = por %p58, %p59
    %p62 = scmp.ne.s32.totalorder %s47, %s61
    %p63 = scmp.eq.s32.totalorder %s16, 0
    %p64 = por %p62, %p63
    %s65 = ssub.s32 %s10, %s17
    %p66 = scmp.eq.s32.totalorder %s65, 0
    %s68 = sadd.s32 %s67, 1
    %s69 = scalar_select %p66, %s67, %s68
    %p72 = pneg %p66
    %p73 = scmp.eq.s32.totalorder %s10, 1
    %p74 = por %p72, %p73
    %p75 = scmp.ne.s32.totalorder %s67, %s70
    %p76 = scmp.eq.s32.totalorder %s10, 0
    %p77 = por %p75, %p76
    %p78 = scmp.ne.s32.totalorder %s67, %s70
    %p79 = scmp.eq.s32.totalorder %s15, 1
    %p80 = por %p78, %p79
    %p81 = scmp.ne.s32.totalorder %s70, %s71
    %p82 = scmp.eq.s32.totalorder %s15, 0
    %p83 = por %p81, %p82
    %p84 = scmp.ne.s32.totalorder %s70, %s71
    %p85 = scmp.eq.s32.totalorder %s16, 1
    %p86 = por %p84, %p85
    %p88 = scmp.ne.s32.totalorder %s71, %s87
    %p89 = scmp.eq.s32.totalorder %s16, 0
    %p90 = por %p88, %p89
    %s91 = ssub.s32 %s10, %s17
    %p92 = scmp.eq.s32.totalorder %s91, 0
    %s94 = sadd.s32 %s93, 1
    %s95 = scalar_select %p92, %s93, %s94
    %p98 = pneg %p92
    %p99 = scmp.eq.s32.totalorder %s10, 1
    %p100 = por %p98, %p99
    %p101 = scmp.ne.s32.totalorder %s93, %s96
    %p102 = scmp.eq.s32.totalorder %s10, 0
    %p103 = por %p101, %p102
    %p104 = scmp.ne.s32.totalorder %s93, %s96
    %p105 = scmp.eq.s32.totalorder %s15, 1
    %p106 = por %p104, %p105
    %p107 = scmp.ne.s32.totalorder %s96, %s97
    %p108 = scmp.eq.s32.totalorder %s15, 0
    %p109 = por %p107, %p108
    %p110 = scmp.ne.s32.totalorder %s96, %s97
    %p111 = scmp.eq.s32.totalorder %s16, 1
    %p112 = por %p110, %p111
    %p114 = scmp.ne.s32.totalorder %s97, %s113
    %p115 = scmp.eq.s32.totalorder %s16, 0
    %p116 = por %p114, %p115
    %p117 = scmp.le.s32.totalorder 1, %s10
    %p118 = scmp.lt.s32.totalorder %s10, 3
    %p119 = pnand %p117, %p118
    %p120 = pneg %p119
    // Predicated region
    $region9: #{gcu_forward.1} parent=5 // pred_check
      _
    $region10: #{gcu_forward.1} parent=5 // pred_check_branch
      %122 = sbr.rel (%p119) target = $region12
    $region11: #{gcu_forward.1} parent=5 // pred_region
      %s123 = ssub.s32 %s10, 1
      // Predicated region
      $region13: #{gcu_forward.1} parent=11 // pred_check
        %p124 = pneg %p57
      $region14: #{gcu_forward.1} parent=11 // pred_check_branch
        %126 = sbr.rel (%p124) target = $region16
      $region15: #{gcu_forward.1} parent=11 // pred_region
        _
      $region16: #{gcu_forward.1} parent=11 // pred_fallthru
        _
    $region12: #{gcu_forward.1} parent=5 // pred_fallthru
      _
    %p127 = scmp.lt.s32.totalorder %s10, 2
    // Predicated region
    $region17: #{gcu_forward.1} parent=5 // pred_check
      %p128 = pneg %p127
    $region18: #{gcu_forward.1} parent=5 // pred_check_branch
      %130 = sbr.rel (%p128) target = $region20
    $region19: #{gcu_forward.1} parent=5 // pred_region
      // Predicated region
      $region21: #{gcu_forward.1} parent=19 // pred_check
        %p131 = pneg %p30
      $region22: #{gcu_forward.1} parent=19 // pred_check_branch
        %133 = sbr.rel (%p131) target = $region24
      $region23: #{gcu_forward.1} parent=19 // pred_region
        %p134 = scmp.lt.s32.totalorder %s10, 1
        %s135 = scalar_select %p134, %s10, 1
        %s136 = smul.addr %s135, 3
        %s137 = smul.addr %s136, 4
        %s138 = scalar_lea.vmem %s0, %s137
      $region24: #{gcu_forward.1} parent=19 // pred_fallthru
        _
    $region20: #{gcu_forward.1} parent=5 // pred_fallthru
      _
    %p139 = scmp.le.s32.totalorder 1, %s10
    %p140 = scmp.lt.s32.totalorder %s10, 3
    %p141 = pnand %p139, %p140
    %p142 = pneg %p141
    // Predicated region
    $region25: #{gcu_forward.1} parent=5 // pred_check
      _
    $region26: #{gcu_forward.1} parent=5 // pred_check_branch
      %144 = sbr.rel (%p141) target = $region28
    $region27: #{gcu_forward.1} parent=5 // pred_region
      %s145 = ssub.s32 %s10, 1
      %p146 = scmp.lt.s32.totalorder %s15, 1
      %s147 = scalar_select %p146, %s15, 1
      %s148 = smul.addr %s147, 3
      %s149 = smul.addr %s148, 4
      %s150 = scalar_lea.vmem %s0, %s149
      %p151 = pneg %p36
      %p152 = pneg %p33
      %p153 = pneg %p57
      %p154 = pneg %p54
      %p155 = pneg %p83
      %p156 = pneg %p80
      %p157 = scmp.lt.s32.totalorder %s15, 1
      %s158 = scalar_select %p157, %s15, 1
      %s159 = smul.addr %s158, 3
      %s160 = smul.addr %s159, 4
      %s161 = scalar_lea.vmem %s2, %s160
      %p162 = pneg %p109
      %p163 = pneg %p106
      %p164 = scmp.lt.s32.totalorder %s15, 1
      %s165 = scalar_select %p164, %s15, 1
      %s166 = smul.addr %s165, 8
      %s167 = scalar_lea.vmem %s3, %s166
      %p168 = scmp.lt.s32.totalorder %s15, 1
      %s169 = scalar_select %p168, %s15, 1
      %s170 = smul.addr %s169, 3
      %s171 = smul.addr %s170, 4
      %s172 = scalar_lea.vmem %s0, %s171
      %p173 = scmp.lt.s32.totalorder %s15, 1
      %s174 = scalar_select %p173, %s15, 1
      %s175 = smul.addr %s174, 3
      %s176 = smul.addr %s175, 4
      %s177 = scalar_lea.vmem %s2, %s176
      %p178 = scmp.lt.s32.totalorder %s15, 1
      %s179 = scalar_select %p178, %s15, 1
      %s180 = smul.addr %s179, 8
      %s181 = scalar_lea.vmem %s3, %s180
      %v183 = vlaneseq
      %v184 = vand.u32 %v183, 127
      %v185 = vadd.s32 %v184, 128
      %v186 = vadd.s32 %v184, 256
      %vm187 = vcmp.lt.s32.totalorder %v184, 0
      %v188 = vsub.s32 0, %v184
      %v189 = vsel %vm187, %v188, %v184
      %v190 = vmul.u32.u64.compose %v189, 3817748708
      %v191 = vextract.low.u32 %v190
      %v192 = vextract.high.u32 %v190
      %v193 = vshrl.u32 %v192, 4
      %v194 = vmul.u32 %v193, 18
      %v195 = vsub.s32 %v189, %v194
      %v196 = vsub.s32 0, %v195
      %v197 = vsel %vm187, %v196, %v195
      %vm198 = vcmp.lt.s32.totalorder %v185, 0
      %v199 = vsub.s32 0, %v185
      %v200 = vsel %vm198, %v199, %v185
      %v201 = vmul.u32.u64.compose %v200, 3817748708
      %v202 = vextract.low.u32 %v201
      %v203 = vextract.high.u32 %v201
      %v204 = vshrl.u32 %v203, 4
      %v205 = vmul.u32 %v204, 18
      %v206 = vsub.s32 %v200, %v205
      %v207 = vsub.s32 0, %v206
      %v208 = vsel %vm198, %v207, %v206
      %vm209 = vcmp.lt.s32.totalorder %v186, 0
      %v210 = vsub.s32 0, %v186
      %v211 = vsel %vm209, %v210, %v186
      %v212 = vmul.u32.u64.compose %v211, 3817748708
      %v213 = vextract.low.u32 %v212
      %v214 = vextract.high.u32 %v212
      %v215 = vshrl.u32 %v214, 4
      %v216 = vmul.u32 %v215, 18
      %v217 = vsub.s32 %v211, %v216
      %v218 = vsub.s32 0, %v217
      %v219 = vsel %vm209, %v218, %v217
      %vm220 = vcmp.ne.s32.totalorder %v197, 0
      %vm221 = vcmp.ne.s32.totalorder %v208, 0
      %vm222 = vcmp.ne.s32.totalorder %v219, 0
      %vm223 = vcmp.lt.s32.totalorder %v197, 0
      %vm224 = vcmp.lt.s32.totalorder %v208, 0
      %vm225 = vcmp.lt.s32.totalorder %v219, 0
      %vm226 = vmand %vm223, %vm220
      %vm227 = vmand %vm224, %vm221
      %vm228 = vmand %vm225, %vm222
      %v229 = vadd.s32 %v197, 18
      %v230 = vadd.s32 %v208, 18
      %v231 = vadd.s32 %v219, 18
      %v232 = vsel %vm226, %v229, %v197
      %v233 = vsel %vm227, %v230, %v208
      %v234 = vsel %vm228, %v231, %v219
      %vm235 = vcmp.lt.s32.totalorder %v232, 16
      %vm236 = vcmp.lt.s32.totalorder %v233, 16
      %vm237 = vcmp.lt.s32.totalorder %v234, 16
      %v238 = vsel %vm235, 1, 0
      %v239 = vsel %vm236, 1, 0
      %v240 = vsel %vm237, 1, 0
      %v241 = vcvt.s32.f32 %v238
      %v242 = vcvt.s32.f32 %v239
      %v243 = vcvt.s32.f32 %v240
      %v244 = vld [vmem:[%s172] sm:$0xff]
      %v245 = vld [vmem:[%s172 + $0x8] sm:$0xf]
      %v246 = vld [vmem:[%s1] sm:$0xf]
      %v247 = vld [vmem:[%s1 + $0x4] sm:$0xf]
      %s248 = scalar_lea.vmem %s1, 8
      %v249 = vld [vmem:[%s248] sm:$0xf]
      %v250 = vld [vmem:[%s248 + $0x4] sm:$0xf]
      %v253 = vunpack.c.l.b16 %v249
      %v254 = vunpack.c.l.b16 %v250
      %v255 = vpack.c.b16 %v254, %v253
      %v258 = vunpack.c.l.b16 %v244
      %v259 = vunpack.c.h.b16 %v244
      %v260 = vunpack.c.l.b16 %v245
      %v261 = vpack.c.b16 %v258, %v258
      %v262 = vpack.c.b16 %v259, %v259
      %v263 = vpack.c.b16 %v260, %v260
      %264 = vrot.lane.b32.xlu0 %v261, 127
      %v265 = vpop.permute.xlu0 %264
      %266 = vrot.lane.b32.xlu0 %v262, 127
      %v267 = vpop.permute.xlu0 %266
      %268 = vrot.lane.b32.xlu0 %v263, 127
      %v269 = vpop.permute.xlu0 %268
      %vm270 = vcmask 1039360
      %v271 = vsel %vm270, %v265, %v267
      %v272 = vsel %vm270, %v267, %v269
      %vm273 = vcmask 64512
      %v275 = vsel %vm273, %v255, 0
      %vm277 = vcmask 1043456
      %v279 = vsel %vm277, %v271, 0
      %v282 = vsel %vm277, %v272, 0
      %v285 = vsel %vm277, %v269, 0
      %287 = vmatprep.subr.bf16.mxu0 %v282
      %288 = vmatpush1.bf16.msra.mxu0 %v279
      %289 = vmatprep.subr.bf16.mxu0 0
      %290 = vmatpush1.bf16.msra.mxu0 0
      %291 = vmatprep.subr.bf16.mxu0 0
      %292 = vmatpush1.bf16.msra.mxu0 0
      %293 = vmatprep.subr.bf16.mxu0 0
      %294 = vmatpush1.bf16.msra.mxu0 0
      %295 = vmatprep.subr.bf16.mxu0 0
      %296 = vmatpush1.bf16.msra.mxu0 0
      %297 = vmatprep.subr.bf16.mxu0 0
      %298 = vmatpush1.bf16.msra.mxu0 0
      %299 = vmatprep.subr.bf16.mxu0 0
      %300 = vmatpush1.bf16.msra.mxu0 0
      %301 = vmatprep.subr.bf16.mxu0 0
      %302 = vmatpush1.bf16.msra.mxu0 0
      %303 = vmatprep.subr.bf16.mxu0 0
      %304 = vmatpush1.bf16.msra.mxu0 0
      %305 = vmatprep.subr.bf16.mxu0 0
      %306 = vmatpush1.bf16.msra.mxu0 0
      %307 = vmatprep.subr.bf16.mxu0 0
      %308 = vmatpush1.bf16.msra.mxu0 0
      %309 = vmatprep.subr.bf16.mxu0 0
      %310 = vmatpush1.bf16.msra.mxu0 0
      %311 = vmatprep.subr.bf16.mxu0 0
      %312 = vmatpush1.bf16.msra.mxu0 0
      %313 = vmatprep.subr.bf16.mxu0 0
      %314 = vmatpush1.bf16.msra.mxu0 0
      %315 = vmatprep.subr.bf16.mxu0 0
      %316 = vmatpush1.bf16.msra.mxu0 0
      %317 = vmatprep.subr.bf16.mxu0 0
      %318 = vmatpush1.bf16.msra.mxu0 0
      %319 = vmatprep.mubr.bf16.mxu0 0
      %320 = vmatmul.mubr.bf16.gmra.mrb[0].mxu0 %v275
      %v321 = vpop.f32.mrb[0].mxu0
      %v322 = vadd.f32 0.0, %v321
      %v323 = vpop.f32.mrb[0].mxu0
      %v324 = vadd.f32 0.0, %v323
      %v325 = vpop.f32.mrb[0].mxu0
      %v326 = vadd.f32 0.0, %v325
      %v327 = vpop.f32.mrb[0].mxu0
      %v328 = vadd.f32 0.0, %v327
      %329 = vdwg.mxu0
      %330 = vmatprep.subr.bf16.mxu0 0
      %331 = vmatpush1.bf16.msra.mxu0 %v285
      %332 = vmatprep.subr.bf16.mxu0 0
      %333 = vmatpush1.bf16.msra.mxu0 0
      %334 = vmatprep.subr.bf16.mxu0 0
      %335 = vmatpush1.bf16.msra.mxu0 0
      %336 = vmatprep.subr.bf16.mxu0 0
      %337 = vmatpush1.bf16.msra.mxu0 0
      %338 = vmatprep.subr.bf16.mxu0 0
      %339 = vmatpush1.bf16.msra.mxu0 0
      %340 = vmatprep.subr.bf16.mxu0 0
      %341 = vmatpush1.bf16.msra.mxu0 0
      %342 = vmatprep.subr.bf16.mxu0 0
      %343 = vmatpush1.bf16.msra.mxu0 0
      %344 = vmatprep.subr.bf16.mxu0 0
      %345 = vmatpush1.bf16.msra.mxu0 0
      %346 = vmatprep.subr.bf16.mxu0 0
      %347 = vmatpush1.bf16.msra.mxu0 0
      %348 = vmatprep.subr.bf16.mxu0 0
      %349 = vmatpush1.bf16.msra.mxu0 0
      %350 = vmatprep.subr.bf16.mxu0 0
      %351 = vmatpush1.bf16.msra.mxu0 0
      %352 = vmatprep.subr.bf16.mxu0 0
      %353 = vmatpush1.bf16.msra.mxu0 0
      %354 = vmatprep.subr.bf16.mxu0 0
      %355 = vmatpush1.bf16.msra.mxu0 0
      %356 = vmatprep.subr.bf16.mxu0 0
      %357 = vmatpush1.bf16.msra.mxu0 0
      %358 = vmatprep.subr.bf16.mxu0 0
      %359 = vmatpush1.bf16.msra.mxu0 0
      %360 = vmatprep.subr.bf16.mxu0 0
      %361 = vmatpush1.bf16.msra.mxu0 0
      %362 = vmatprep.mubr.bf16.mxu0 0
      %363 = vmatmul.mubr.bf16.gmra.mrb[0].mxu0 %v275
      %v364 = vpop.f32.mrb[0].mxu0
      %v365 = vadd.f32 0.0, %v364
      %v366 = vpop.f32.mrb[0].mxu0
      %v367 = vpop.f32.mrb[0].mxu0
      %v368 = vadd.f32 0.0, %v367
      %v369 = vpop.f32.mrb[0].mxu0
      %370 = vdwg.mxu0
      %v373 = vunpack.c.l.b16 %v246
      %v374 = vunpack.c.l.b16 %v247
      %v375 = vpack.c.b16 %v374, %v373
      %v377 = vsel %vm273, %v375, 0
      %v380 = vsel %vm277, %v261, 0
      %v383 = vsel %vm277, %v262, 0
      %v386 = vsel %vm277, %v263, 0
      %388 = vmatprep.subr.bf16.mxu0 %v383
      %389 = vmatpush1.bf16.msra.mxu0 %v380
      %390 = vmatprep.subr.bf16.mxu0 0
      %391 = vmatpush1.bf16.msra.mxu0 0
      %392 = vmatprep.subr.bf16.mxu0 0
      %393 = vmatpush1.bf16.msra.mxu0 0
      %394 = vmatprep.subr.bf16.mxu0 0
      %395 = vmatpush1.bf16.msra.mxu0 0
      %396 = vmatprep.subr.bf16.mxu0 0
      %397 = vmatpush1.bf16.msra.mxu0 0
      %398 = vmatprep.subr.bf16.mxu0 0
      %399 = vmatpush1.bf16.msra.mxu0 0
      %400 = vmatprep.subr.bf16.mxu0 0
      %401 = vmatpush1.bf16.msra.mxu0 0
      %402 = vmatprep.subr.bf16.mxu0 0
      %403 = vmatpush1.bf16.msra.mxu0 0
      %404 = vmatprep.subr.bf16.mxu0 0
      %405 = vmatpush1.bf16.msra.mxu0 0
      %406 = vmatprep.subr.bf16.mxu0 0
      %407 = vmatpush1.bf16.msra.mxu0 0
      %408 = vmatprep.subr.bf16.mxu0 0
      %409 = vmatpush1.bf16.msra.mxu0 0
      %410 = vmatprep.subr.bf16.mxu0 0
      %411 = vmatpush1.bf16.msra.mxu0 0
      %412 = vmatprep.subr.bf16.mxu0 0
      %413 = vmatpush1.bf16.msra.mxu0 0
      %414 = vmatprep.subr.bf16.mxu0 0
      %415 = vmatpush1.bf16.msra.mxu0 0
      %416 = vmatprep.subr.bf16.mxu0 0
      %417 = vmatpush1.bf16.msra.mxu0 0
      %418 = vmatprep.subr.bf16.mxu0 0
      %419 = vmatpush1.bf16.msra.mxu0 0
      %420 = vmatprep.mubr.bf16.mxu0 0
      %421 = vmatmul.mubr.bf16.gmra.mrb[0].mxu0 %v377
      %v422 = vpop.f32.mrb[0].mxu0
      %v423 = vadd.f32 %v322, %v422
      %v424 = vpop.f32.mrb[0].mxu0
      %v425 = vadd.f32 %v324, %v424
      %v426 = vpop.f32.mrb[0].mxu0
      %v427 = vadd.f32 %v326, %v426
      %v428 = vpop.f32.mrb[0].mxu0
      %v429 = vadd.f32 %v328, %v428
      %430 = vdwg.mxu0
      %431 = vmatprep.subr.bf16.mxu0 0
      %432 = vmatpush1.bf16.msra.mxu0 %v386
      %433 = vmatprep.subr.bf16.mxu0 0
      %434 = vmatpush1.bf16.msra.mxu0 0
      %435 = vmatprep.subr.bf16.mxu0 0
      %436 = vmatpush1.bf16.msra.mxu0 0
      %437 = vmatprep.subr.bf16.mxu0 0
      %438 = vmatpush1.bf16.msra.mxu0 0
      %439 = vmatprep.subr.bf16.mxu0 0
      %440 = vmatpush1.bf16.msra.mxu0 0
      %441 = vmatprep.subr.bf16.mxu0 0
      %442 = vmatpush1.bf16.msra.mxu0 0
      %443 = vmatprep.subr.bf16.mxu0 0
      %444 = vmatpush1.bf16.msra.mxu0 0
      %445 = vmatprep.subr.bf16.mxu0 0
      %446 = vmatpush1.bf16.msra.mxu0 0
      %447 = vmatprep.subr.bf16.mxu0 0
      %448 = vmatpush1.bf16.msra.mxu0 0
      %449 = vmatprep.subr.bf16.mxu0 0
      %450 = vmatpush1.bf16.msra.mxu0 0
      %451 = vmatprep.subr.bf16.mxu0 0
      %452 = vmatpush1.bf16.msra.mxu0 0
      %453 = vmatprep.subr.bf16.mxu0 0
      %454 = vmatpush1.bf16.msra.mxu0 0
      %455 = vmatprep.subr.bf16.mxu0 0
      %456 = vmatpush1.bf16.msra.mxu0 0
      %457 = vmatprep.subr.bf16.mxu0 0
      %458 = vmatpush1.bf16.msra.mxu0 0
      %459 = vmatprep.subr.bf16.mxu0 0
      %460 = vmatpush1.bf16.msra.mxu0 0
      %461 = vmatprep.subr.bf16.mxu0 0
      %462 = vmatpush1.bf16.msra.mxu0 0
      %463 = vmatprep.mubr.bf16.mxu0 0
      %464 = vmatmul.mubr.bf16.gmra.mrb[0].mxu0 %v377
      %v465 = vpop.f32.mrb[0].mxu0
      %v466 = vadd.f32 %v365, %v465
      %v467 = vpop.f32.mrb[0].mxu0
      %v468 = vpop.f32.mrb[0].mxu0
      %v469 = vadd.f32 %v368, %v468
      %v470 = vpop.f32.mrb[0].mxu0
      %471 = vdwg.mxu0
      %s472 = scalar_lea.vmem %s1, 16
      %v473 = vld [vmem:[%s472] sm:$0xf]
      %v474 = vld [vmem:[%s472 + $0x4] sm:$0xf]
      %v477 = vunpack.c.l.b16 %v473
      %v478 = vunpack.c.l.b16 %v474
      %v479 = vpack.c.b16 %v478, %v477
      %480 = vrot.lane.b32.xlu0 %v261, 126
      %v481 = vpop.permute.xlu0 %480
      %482 = vrot.lane.b32.xlu0 %v262, 126
      %v483 = vpop.permute.xlu0 %482
      %484 = vrot.lane.b32.xlu0 %v263, 126
      %v485 = vpop.permute.xlu0 %484
      %vm486 = vcmask 1031168
      %v487 = vsel %vm486, %v481, %v483
      %v488 = vsel %vm486, %v483, %v485
      %v490 = vsel %vm273, %v479, 0
      %v493 = vsel %vm277, %v487, 0
      %v496 = vsel %vm277, %v488, 0
      %v499 = vsel %vm277, %v485, 0
      %501 = vmatprep.subr.bf16.mxu0 %v496
      %502 = vmatpush1.bf16.msra.mxu0 %v493
      %503 = vmatprep.subr.bf16.mxu0 0
      %504 = vmatpush1.bf16.msra.mxu0 0
      %505 = vmatprep.subr.bf16.mxu0 0
      %506 = vmatpush1.bf16.msra.mxu0 0
      %507 = vmatprep.subr.bf16.mxu0 0
      %508 = vmatpush1.bf16.msra.mxu0 0
      %509 = vmatprep.subr.bf16.mxu0 0
      %510 = vmatpush1.bf16.msra.mxu0 0
      %511 = vmatprep.subr.bf16.mxu0 0
      %512 = vmatpush1.bf16.msra.mxu0 0
      %513 = vmatprep.subr.bf16.mxu0 0
      %514 = vmatpush1.bf16.msra.mxu0 0
      %515 = vmatprep.subr.bf16.mxu0 0
      %516 = vmatpush1.bf16.msra.mxu0 0
      %517 = vmatprep.subr.bf16.mxu0 0
      %518 = vmatpush1.bf16.msra.mxu0 0
      %519 = vmatprep.subr.bf16.mxu0 0
      %520 = vmatpush1.bf16.msra.mxu0 0
      %521 = vmatprep.subr.bf16.mxu0 0
      %522 = vmatpush1.bf16.msra.mxu0 0
      %523 = vmatprep.subr.bf16.mxu0 0
      %524 = vmatpush1.bf16.msra.mxu0 0
      %525 = vmatprep.subr.bf16.mxu0 0
      %526 = vmatpush1.bf16.msra.mxu0 0
      %527 = vmatprep.subr.bf16.mxu0 0
      %528 = vmatpush1.bf16.msra.mxu0 0
      %529 = vmatprep.subr.bf16.mxu0 0
      %530 = vmatpush1.bf16.msra.mxu0 0
      %531 = vmatprep.subr.bf16.mxu0 0
      %532 = vmatpush1.bf16.msra.mxu0 0
      %533 = vmatprep.mubr.bf16.mxu0 0
      %534 = vmatmul.mubr.bf16.gmra.mrb[0].mxu0 %v490
      %v535 = vpop.f32.mrb[0].mxu0
      %v536 = vadd.f32 0.0, %v535
      %v537 = vpop.f32.mrb[0].mxu0
      %v538 = vadd.f32 0.0, %v537
      %v539 = vpop.f32.mrb[0].mxu0
      %v540 = vadd.f32 0.0, %v539
      %v541 = vpop.f32.mrb[0].mxu0
      %v542 = vadd.f32 0.0, %v541
      %543 = vdwg.mxu0
      %544 = vmatprep.subr.bf16.mxu0 0
      %545 = vmatpush1.bf16.msra.mxu0 %v499
      %546 = vmatprep.subr.bf16.mxu0 0
      %547 = vmatpush1.bf16.msra.mxu0 0
      %548 = vmatprep.subr.bf16.mxu0 0
      %549 = vmatpush1.bf16.msra.mxu0 0
      %550 = vmatprep.subr.bf16.mxu0 0
      %551 = vmatpush1.bf16.msra.mxu0 0
      %552 = vmatprep.subr.bf16.mxu0 0
      %553 = vmatpush1.bf16.msra.mxu0 0
      %554 = vmatprep.subr.bf16.mxu0 0
      %555 = vmatpush1.bf16.msra.mxu0 0
      %556 = vmatprep.subr.bf16.mxu0 0
      %557 = vmatpush1.bf16.msra.mxu0 0
      %558 = vmatprep.subr.bf16.mxu0 0
      %559 = vmatpush1.bf16.msra.mxu0 0
      %560 = vmatprep.subr.bf16.mxu0 0
      %561 = vmatpush1.bf16.msra.mxu0 0
      %562 = vmatprep.subr.bf16.mxu0 0
      %563 = vmatpush1.bf16.msra.mxu0 0
      %564 = vmatprep.subr.bf16.mxu0 0
      %565 = vmatpush1.bf16.msra.mxu0 0
      %566 = vmatprep.subr.bf16.mxu0 0
      %567 = vmatpush1.bf16.msra.mxu0 0
      %568 = vmatprep.subr.bf16.mxu0 0
      %569 = vmatpush1.bf16.msra.mxu0 0
      %570 = vmatprep.subr.bf16.mxu0 0
      %571 = vmatpush1.bf16.msra.mxu0 0
      %572 = vmatprep.subr.bf16.mxu0 0
      %573 = vmatpush1.bf16.msra.mxu0 0
      %574 = vmatprep.subr.bf16.mxu0 0
      %575 = vmatpush1.bf16.msra.mxu0 0
      %576 = vmatprep.mubr.bf16.mxu0 0
      %577 = vmatmul.mubr.bf16.gmra.mrb[0].mxu0 %v490
      %v578 = vpop.f32.mrb[0].mxu0
      %v579 = vadd.f32 0.0, %v578
      %v580 = vpop.f32.mrb[0].mxu0
      %v581 = vpop.f32.mrb[0].mxu0
      %v582 = vadd.f32 0.0, %v581
      %v583 = vpop.f32.mrb[0].mxu0
      %584 = vdwg.mxu0
      %v585 = vadd.f32 %v423, %v536
      %v586 = vadd.f32 %v425, %v538
      %v587 = vadd.f32 %v466, %v579
      %v588 = vadd.f32 %v427, %v540
      %v589 = vadd.f32 %v429, %v542
      %v590 = vadd.f32 %v469, %v582
      %s591 = scalar_lea.vmem %s1, 24
      %v592 = vld [vmem:[%s591] sm:$0xf]
      %v593 = vld [vmem:[%s591 + $0x4] sm:$0xf]
      %v596 = vunpack.c.l.b16 %v592
      %v597 = vunpack.c.l.b16 %v593
      %v598 = vpack.c.b16 %v597, %v596
      %599 = vrot.lane.b32.xlu0 %v261, 110
      %v600 = vpop.permute.xlu0 %599
      %601 = vrot.lane.b32.xlu0 %v262, 110
      %v602 = vpop.permute.xlu0 %601
      %603 = vrot.lane.b32.xlu0 %v263, 110
      %v604 = vpop.permute.xlu0 %603
      %vm605 = vcmask 900096
      %v606 = vsel %vm605, %v600, %v602
      %v607 = vsel %vm605, %v602, %v604
      %v609 = vsel %vm273, %v598, 0
      %v612 = vsel %vm277, %v606, 0
      %v615 = vsel %vm277, %v607, 0
      %v618 = vsel %vm277, %v604, 0
      %620 = vmatprep.subr.bf16.mxu0 %v615
      %621 = vmatpush1.bf16.msra.mxu0 %v612
      %622 = vmatprep.subr.bf16.mxu0 0
      %623 = vmatpush1.bf16.msra.mxu0 0
      %624 = vmatprep.subr.bf16.mxu0 0
      %625 = vmatpush1.bf16.msra.mxu0 0
      %626 = vmatprep.subr.bf16.mxu0 0
      %627 = vmatpush1.bf16.msra.mxu0 0
      %628 = vmatprep.subr.bf16.mxu0 0
      %629 = vmatpush1.bf16.msra.mxu0 0
      %630 = vmatprep.subr.bf16.mxu0 0
      %631 = vmatpush1.bf16.msra.mxu0 0
      %632 = vmatprep.subr.bf16.mxu0 0
      %633 = vmatpush1.bf16.msra.mxu0 0
      %634 = vmatprep.subr.bf16.mxu0 0
      %635 = vmatpush1.bf16.msra.mxu0 0
      %636 = vmatprep.subr.bf16.mxu0 0
      %637 = vmatpush1.bf16.msra.mxu0 0
      %638 = vmatprep.subr.bf16.mxu0 0
      %639 = vmatpush1.bf16.msra.mxu0 0
      %640 = vmatprep.subr.bf16.mxu0 0
      %641 = vmatpush1.bf16.msra.mxu0 0
      %642 = vmatprep.subr.bf16.mxu0 0
      %643 = vmatpush1.bf16.msra.mxu0 0
      %644 = vmatprep.subr.bf16.mxu0 0
      %645 = vmatpush1.bf16.msra.mxu0 0
      %646 = vmatprep.subr.bf16.mxu0 0
      %647 = vmatpush1.bf16.msra.mxu0 0
      %648 = vmatprep.subr.bf16.mxu0 0
      %649 = vmatpush1.bf16.msra.mxu0 0
      %650 = vmatprep.subr.bf16.mxu0 0
      %651 = vmatpush1.bf16.msra.mxu0 0
      %652 = vmatprep.mubr.bf16.mxu0 0
      %653 = vmatmul.mubr.bf16.gmra.mrb[0].mxu0 %v609
      %v654 = vpop.f32.mrb[0].mxu0
      %v655 = vadd.f32 0.0, %v654
      %v656 = vpop.f32.mrb[0].mxu0
      %v657 = vadd.f32 0.0, %v656
      %v658 = vpop.f32.mrb[0].mxu0
      %v659 = vadd.f32 0.0, %v658
      %v660 = vpop.f32.mrb[0].mxu0
      %v661 = vadd.f32 0.0, %v660
      %662 = vdwg.mxu0
      %663 = vmatprep.subr.bf16.mxu0 0
      %664 = vmatpush1.bf16.msra.mxu0 %v618
      %665 = vmatprep.subr.bf16.mxu0 0
      %666 = vmatpush1.bf16.msra.mxu0 0
      %667 = vmatprep.subr.bf16.mxu0 0
      %668 = vmatpush1.bf16.msra.mxu0 0
      %669 = vmatprep.subr.bf16.mxu0 0
      %670 = vmatpush1.bf16.msra.mxu0 0
      %671 = vmatprep.subr.bf16.mxu0 0
      %672 = vmatpush1.bf16.msra.mxu0 0
      %673 = vmatprep.subr.bf16.mxu0 0
      %674 = vmatpush1.bf16.msra.mxu0 0
      %675 = vmatprep.subr.bf16.mxu0 0
      %676 = vmatpush1.bf16.msra.mxu0 0
      %677 = vmatprep.subr.bf16.mxu0 0
      %678 = vmatpush1.bf16.msra.mxu0 0
      %679 = vmatprep.subr.bf16.mxu0 0
      %680 = vmatpush1.bf16.msra.mxu0 0
      %681 = vmatprep.subr.bf16.mxu0 0
      %682 = vmatpush1.bf16.msra.mxu0 0
      %683 = vmatprep.subr.bf16.mxu0 0
      %684 = vmatpush1.bf16.msra.mxu0 0
      %685 = vmatprep.subr.bf16.mxu0 0
      %686 = vmatpush1.bf16.msra.mxu0 0
      %687 = vmatprep.subr.bf16.mxu0 0
      %688 = vmatpush1.bf16.msra.mxu0 0
      %689 = vmatprep.subr.bf16.mxu0 0
      %690 = vmatpush1.bf16.msra.mxu0 0
      %691 = vmatprep.subr.bf16.mxu0 0
      %692 = vmatpush1.bf16.msra.mxu0 0
      %693 = vmatprep.subr.bf16.mxu0 0
      %694 = vmatpush1.bf16.msra.mxu0 0
      %695 = vmatprep.mubr.bf16.mxu0 0
      %696 = vmatmul.mubr.bf16.gmra.mrb[0].mxu0 %v609
      %v697 = vpop.f32.mrb[0].mxu0
      %v698 = vadd.f32 0.0, %v697
      %v699 = vpop.f32.mrb[0].mxu0
      %v700 = vpop.f32.mrb[0].mxu0
      %v701 = vadd.f32 0.0, %v700
      %v702 = vpop.f32.mrb[0].mxu0
      %703 = vdwg.mxu0
      %v704 = vadd.f32 %v585, %v655
      %v705 = vadd.f32 %v586, %v657
      %v706 = vadd.f32 %v587, %v698
      %v707 = vadd.f32 %v588, %v659
      %v708 = vadd.f32 %v589, %v661
      %v709 = vadd.f32 %v590, %v701
      %s710 = scalar_lea.vmem %s1, 32
      %v711 = vld [vmem:[%s710] sm:$0xf]
      %v712 = vld [vmem:[%s710 + $0x4] sm:$0xf]
      %v715 = vunpack.c.l.b16 %v711
      %v716 = vunpack.c.l.b16 %v712
      %v717 = vpack.c.b16 %v716, %v715
      %718 = vrot.lane.b32.xlu0 %v261, 109
      %v719 = vpop.permute.xlu0 %718
      %720 = vrot.lane.b32.xlu0 %v262, 109
      %v721 = vpop.permute.xlu0 %720
      %722 = vrot.lane.b32.xlu0 %v263, 109
      %v723 = vpop.permute.xlu0 %722
      %vm724 = vcmask 891904
      %v725 = vsel %vm724, %v719, %v721
      %v726 = vsel %vm724, %v721, %v723
      %v728 = vsel %vm273, %v717, 0
      %v731 = vsel %vm277, %v725, 0
      %v734 = vsel %vm277, %v726, 0
      %v737 = vsel %vm277, %v723, 0
      %739 = vmatprep.subr.bf16.mxu0 %v734
      %740 = vmatpush1.bf16.msra.mxu0 %v731
      %741 = vmatprep.subr.bf16.mxu0 0
      %742 = vmatpush1.bf16.msra.mxu0 0
      %743 = vmatprep.subr.bf16.mxu0 0
      %744 = vmatpush1.bf16.msra.mxu0 0
      %745 = vmatprep.subr.bf16.mxu0 0
      %746 = vmatpush1.bf16.msra.mxu0 0
      %747 = vmatprep.subr.bf16.mxu0 0
      %748 = vmatpush1.bf16.msra.mxu0 0
      %749 = vmatprep.subr.bf16.mxu0 0
      %750 = vmatpush1.bf16.msra.mxu0 0
      %751 = vmatprep.subr.bf16.mxu0 0
      %752 = vmatpush1.bf16.msra.mxu0 0
      %753 = vmatprep.subr.bf16.mxu0 0
      %754 = vmatpush1.bf16.msra.mxu0 0
      %755 = vmatprep.subr.bf16.mxu0 0
      %756 = vmatpush1.bf16.msra.mxu0 0
      %757 = vmatprep.subr.bf16.mxu0 0
      %758 = vmatpush1.bf16.msra.mxu0 0
      %759 = vmatprep.subr.bf16.mxu0 0
      %760 = vmatpush1.bf16.msra.mxu0 0
      %761 = vmatprep.subr.bf16.mxu0 0
      %762 = vmatpush1.bf16.msra.mxu0 0
      %763 = vmatprep.subr.bf16.mxu0 0
      %764 = vmatpush1.bf16.msra.mxu0 0
      %765 = vmatprep.subr.bf16.mxu0 0
      %766 = vmatpush1.bf16.msra.mxu0 0
      %767 = vmatprep.subr.bf16.mxu0 0
      %768 = vmatpush1.bf16.msra.mxu0 0
      %769 = vmatprep.subr.bf16.mxu0 0
      %770 = vmatpush1.bf16.msra.mxu0 0
      %771 = vmatprep.mubr.bf16.mxu0 0
      %772 = vmatmul.mubr.bf16.gmra.mrb[0].mxu0 %v728
      %v773 = vpop.f32.mrb[0].mxu0
      %v774 = vadd.f32 0.0, %v773
      %v775 = vpop.f32.mrb[0].mxu0
      %v776 = vadd.f32 0.0, %v775
      %v777 = vpop.f32.mrb[0].mxu0
      %v778 = vadd.f32 0.0, %v777
      %v779 = vpop.f32.mrb[0].mxu0
      %v780 = vadd.f32 0.0, %v779
      %781 = vdwg.mxu0
      %782 = vmatprep.subr.bf16.mxu0 0
      %783 = vmatpush1.bf16.msra.mxu0 %v737
      %784 = vmatprep.subr.bf16.mxu0 0
      %785 = vmatpush1.bf16.msra.mxu0 0
      %786 = vmatprep.subr.bf16.mxu0 0
      %787 = vmatpush1.bf16.msra.mxu0 0
      %788 = vmatprep.subr.bf16.mxu0 0
      %789 = vmatpush1.bf16.msra.mxu0 0
      %790 = vmatprep.subr.bf16.mxu0 0
      %791 = vmatpush1.bf16.msra.mxu0 0
      %792 = vmatprep.subr.bf16.mxu0 0
      %793 = vmatpush1.bf16.msra.mxu0 0
      %794 = vmatprep.subr.bf16.mxu0 0
      %795 = vmatpush1.bf16.msra.mxu0 0
      %796 = vmatprep.subr.bf16.mxu0 0
      %797 = vmatpush1.bf16.msra.mxu0 0
      %798 = vmatprep.subr.bf16.mxu0 0
      %799 = vmatpush1.bf16.msra.mxu0 0
      %800 = vmatprep.subr.bf16.mxu0 0
      %801 = vmatpush1.bf16.msra.mxu0 0
      %802 = vmatprep.subr.bf16.mxu0 0
      %803 = vmatpush1.bf16.msra.mxu0 0
      %804 = vmatprep.subr.bf16.mxu0 0
      %805 = vmatpush1.bf16.msra.mxu0 0
      %806 = vmatprep.subr.bf16.mxu0 0
      %807 = vmatpush1.bf16.msra.mxu0 0
      %808 = vmatprep.subr.bf16.mxu0 0
      %809 = vmatpush1.bf16.msra.mxu0 0
      %810 = vmatprep.subr.bf16.mxu0 0
      %811 = vmatpush1.bf16.msra.mxu0 0
      %812 = vmatprep.subr.bf16.mxu0 0
      %813 = vmatpush1.bf16.msra.mxu0 0
      %814 = vmatprep.mubr.bf16.mxu0 0
      %815 = vmatmul.mubr.bf16.gmra.mrb[0].mxu0 %v728
      %v816 = vpop.f32.mrb[0].mxu0
      %v817 = vadd.f32 0.0, %v816
      %v818 = vpop.f32.mrb[0].mxu0
      %v819 = vpop.f32.mrb[0].mxu0
      %v820 = vadd.f32 0.0, %v819
      %v821 = vpop.f32.mrb[0].mxu0
      %822 = vdwg.mxu0
      %v823 = vadd.f32 %v704, %v774
      %v824 = vadd.f32 %v705, %v776
      %v825 = vadd.f32 %v706, %v817
      %v826 = vadd.f32 %v707, %v778
      %v827 = vadd.f32 %v708, %v780
      %v828 = vadd.f32 %v709, %v820
      %s829 = scalar_lea.vmem %s1, 40
      %v830 = vld [vmem:[%s829] sm:$0xf]
      %v831 = vld [vmem:[%s829 + $0x4] sm:$0xf]
      %v834 = vunpack.c.l.b16 %v830
      %v835 = vunpack.c.l.b16 %v831
      %v836 = vpack.c.b16 %v835, %v834
      %837 = vrot.lane.b32.xlu0 %v261, 108
      %v838 = vpop.permute.xlu0 %837
      %839 = vrot.lane.b32.xlu0 %v262, 108
      %v840 = vpop.permute.xlu0 %839
      %841 = vrot.lane.b32.xlu0 %v263, 108
      %v842 = vpop.permute.xlu0 %841
      %vm843 = vcmask 883712
      %v844 = vsel %vm843, %v838, %v840
      %v845 = vsel %vm843, %v840, %v842
      %v847 = vsel %vm273, %v836, 0
      %v850 = vsel %vm277, %v844, 0
      %v853 = vsel %vm277, %v845, 0
      %v856 = vsel %vm277, %v842, 0
      %858 = vmatprep.subr.bf16.mxu0 %v853
      %859 = vmatpush1.bf16.msra.mxu0 %v850
      %860 = vmatprep.subr.bf16.mxu0 0
      %861 = vmatpush1.bf16.msra.mxu0 0
      %862 = vmatprep.subr.bf16.mxu0 0
      %863 = vmatpush1.bf16.msra.mxu0 0
      %864 = vmatprep.subr.bf16.mxu0 0
      %865 = vmatpush1.bf16.msra.mxu0 0
      %866 = vmatprep.subr.bf16.mxu0 0
      %867 = vmatpush1.bf16.msra.mxu0 0
      %868 = vmatprep.subr.bf16.mxu0 0
      %869 = vmatpush1.bf16.msra.mxu0 0
      %870 = vmatprep.subr.bf16.mxu0 0
      %871 = vmatpush1.bf16.msra.mxu0 0
      %872 = vmatprep.subr.bf16.mxu0 0
      %873 = vmatpush1.bf16.msra.mxu0 0
      %874 = vmatprep.subr.bf16.mxu0 0
      %875 = vmatpush1.bf16.msra.mxu0 0
      %876 = vmatprep.subr.bf16.mxu0 0
      %877 = vmatpush1.bf16.msra.mxu0 0
      %878 = vmatprep.subr.bf16.mxu0 0
      %879 = vmatpush1.bf16.msra.mxu0 0
      %880 = vmatprep.subr.bf16.mxu0 0
      %881 = vmatpush1.bf16.msra.mxu0 0
      %882 = vmatprep.subr.bf16.mxu0 0
      %883 = vmatpush1.bf16.msra.mxu0 0
      %884 = vmatprep.subr.bf16.mxu0 0
      %885 = vmatpush1.bf16.msra.mxu0 0
      %886 = vmatprep.subr.bf16.mxu0 0
      %887 = vmatpush1.bf16.msra.mxu0 0
      %888 = vmatprep.subr.bf16.mxu0 0
      %889 = vmatpush1.bf16.msra.mxu0 0
      %890 = vmatprep.mubr.bf16.mxu0 0
      %891 = vmatmul.mubr.bf16.gmra.mrb[0].mxu0 %v847
      %v892 = vpop.f32.mrb[0].mxu0
      %v893 = vadd.f32 0.0, %v892
      %v894 = vpop.f32.mrb[0].mxu0
      %v895 = vadd.f32 0.0, %v894
      %v896 = vpop.f32.mrb[0].mxu0
      %v897 = vadd.f32 0.0, %v896
      %v898 = vpop.f32.mrb[0].mxu0
      %v899 = vadd.f32 0.0, %v898
      %900 = vdwg.mxu0
      %901 = vmatprep.subr.bf16.mxu0 0
      %902 = vmatpush1.bf16.msra.mxu0 %v856
      %903 = vmatprep.subr.bf16.mxu0 0
      %904 = vmatpush1.bf16.msra.mxu0 0
      %905 = vmatprep.subr.bf16.mxu0 0
      %906 = vmatpush1.bf16.msra.mxu0 0
      %907 = vmatprep.subr.bf16.mxu0 0
      %908 = vmatpush1.bf16.msra.mxu0 0
      %909 = vmatprep.subr.bf16.mxu0 0
      %910 = vmatpush1.bf16.msra.mxu0 0
      %911 = vmatprep.subr.bf16.mxu0 0
      %912 = vmatpush1.bf16.msra.mxu0 0
      %913 = vmatprep.subr.bf16.mxu0 0
      %914 = vmatpush1.bf16.msra.mxu0 0
      %915 = vmatprep.subr.bf16.mxu0 0
      %916 = vmatpush1.bf16.msra.mxu0 0
      %917 = vmatprep.subr.bf16.mxu0 0
      %918 = vmatpush1.bf16.msra.mxu0 0
      %919 = vmatprep.subr.bf16.mxu0 0
      %920 = vmatpush1.bf16.msra.mxu0 0
      %921 = vmatprep.subr.bf16.mxu0 0
      %922 = vmatpush1.bf16.msra.mxu0 0
      %923 = vmatprep.subr.bf16.mxu0 0
      %924 = vmatpush1.bf16.msra.mxu0 0
      %925 = vmatprep.subr.bf16.mxu0 0
      %926 = vmatpush1.bf16.msra.mxu0 0
      %927 = vmatprep.subr.bf16.mxu0 0
      %928 = vmatpush1.bf16.msra.mxu0 0
      %929 = vmatprep.subr.bf16.mxu0 0
      %930 = vmatpush1.bf16.msra.mxu0 0
      %931 = vmatprep.subr.bf16.mxu0 0
      %932 = vmatpush1.bf16.msra.mxu0 0
      %933 = vmatprep.mubr.bf16.mxu0 0
      %934 = vmatmul.mubr.bf16.gmra.mrb[0].mxu0 %v847
      %v935 = vpop.f32.mrb[0].mxu0
      %v936 = vadd.f32 0.0, %v935
      %v937 = vpop.f32.mrb[0].mxu0
      %v938 = vpop.f32.mrb[0].mxu0
      %v939 = vadd.f32 0.0, %v938
      %v940 = vpop.f32.mrb[0].mxu0
      %941 = vdwg.mxu0
      %v942 = vadd.f32 %v823, %v893
      %v943 = vadd.f32 %v824, %v895
      %v944 = vadd.f32 %v825, %v936
      %v945 = vadd.f32 %v826, %v897
      %v946 = vadd.f32 %v827, %v899
      %v947 = vadd.f32 %v828, %v939
      %s948 = scalar_lea.vmem %s1, 48
      %v949 = vld [vmem:[%s948] sm:$0xf]
      %v950 = vld [vmem:[%s948 + $0x4] sm:$0xf]
      %v953 = vunpack.c.l.b16 %v949
      %v954 = vunpack.c.l.b16 %v950
      %v955 = vpack.c.b16 %v954, %v953
      %956 = vrot.lane.b32.xlu0 %v261, 92
      %v957 = vpop.permute.xlu0 %956
      %958 = vrot.lane.b32.xlu0 %v262, 92
      %v959 = vpop.permute.xlu0 %958
      %960 = vrot.lane.b32.xlu0 %v263, 92
      %v961 = vpop.permute.xlu0 %960
      %vm962 = vcmask 752640
      %v963 = vsel %vm962, %v957, %v959
      %v964 = vsel %vm962, %v959, %v961
      %v966 = vsel %vm273, %v955, 0
      %v969 = vsel %vm277, %v963, 0
      %v972 = vsel %vm277, %v964, 0
      %v975 = vsel %vm277, %v961, 0
      %977 = vmatprep.subr.bf16.mxu0 %v972
      %978 = vmatpush1.bf16.msra.mxu0 %v969
      %979 = vmatprep.subr.bf16.mxu0 0
      %980 = vmatpush1.bf16.msra.mxu0 0
      %981 = vmatprep.subr.bf16.mxu0 0
      %982 = vmatpush1.bf16.msra.mxu0 0
      %983 = vmatprep.subr.bf16.mxu0 0
      %984 = vmatpush1.bf16.msra.mxu0 0
      %985 = vmatprep.subr.bf16.mxu0 0
      %986 = vmatpush1.bf16.msra.mxu0 0
      %987 = vmatprep.subr.bf16.mxu0 0
      %988 = vmatpush1.bf16.msra.mxu0 0
      %989 = vmatprep.subr.bf16.mxu0 0
      %990 = vmatpush1.bf16.msra.mxu0 0
      %991 = vmatprep.subr.bf16.mxu0 0
      %992 = vmatpush1.bf16.msra.mxu0 0
      %993 = vmatprep.subr.bf16.mxu0 0
      %994 = vmatpush1.bf16.msra.mxu0 0
      %995 = vmatprep.subr.bf16.mxu0 0
      %996 = vmatpush1.bf16.msra.mxu0 0
      %997 = vmatprep.subr.bf16.mxu0 0
      %998 = vmatpush1.bf16.msra.mxu0 0
      %999 = vmatprep.subr.bf16.mxu0 0
      %1000 = vmatpush1.bf16.msra.mxu0 0
      %1001 = vmatprep.subr.bf16.mxu0 0
      %1002 = vmatpush1.bf16.msra.mxu0 0
      %1003 = vmatprep.subr.bf16.mxu0 0
      %1004 = vmatpush1.bf16.msra.mxu0 0
      %1005 = vmatprep.subr.bf16.mxu0 0
      %1006 = vmatpush1.bf16.msra.mxu0 0
      %1007 = vmatprep.subr.bf16.mxu0 0
      %1008 = vmatpush1.bf16.msra.mxu0 0
      %1009 = vmatprep.mubr.bf16.mxu0 0
      %1010 = vmatmul.mubr.bf16.gmra.mrb[0].mxu0 %v966
      %v1011 = vpop.f32.mrb[0].mxu0
      %v1012 = vadd.f32 0.0, %v1011
      %v1013 = vpop.f32.mrb[0].mxu0
      %v1014 = vadd.f32 0.0, %v1013
      %v1015 = vpop.f32.mrb[0].mxu0
      %v1016 = vadd.f32 0.0, %v1015
      %v1017 = vpop.f32.mrb[0].mxu0
      %v1018 = vadd.f32 0.0, %v1017
      %1019 = vdwg.mxu0
      %1020 = vmatprep.subr.bf16.mxu0 0
      %1021 = vmatpush1.bf16.msra.mxu0 %v975
      %1022 = vmatprep.subr.bf16.mxu0 0
      %1023 = vmatpush1.bf16.msra.mxu0 0
      %1024 = vmatprep.subr.bf16.mxu0 0
      %1025 = vmatpush1.bf16.msra.mxu0 0
      %1026 = vmatprep.subr.bf16.mxu0 0
      %1027 = vmatpush1.bf16.msra.mxu0 0
      %1028 = vmatprep.subr.bf16.mxu0 0
      %1029 = vmatpush1.bf16.msra.mxu0 0
      %1030 = vmatprep.subr.bf16.mxu0 0
      %1031 = vmatpush1.bf16.msra.mxu0 0
      %1032 = vmatprep.subr.bf16.mxu0 0
      %1033 = vmatpush1.bf16.msra.mxu0 0
      %1034 = vmatprep.subr.bf16.mxu0 0
      %1035 = vmatpush1.bf16.msra.mxu0 0
      %1036 = vmatprep.subr.bf16.mxu0 0
      %1037 = vmatpush1.bf16.msra.mxu0 0
      %1038 = vmatprep.subr.bf16.mxu0 0
      %1039 = vmatpush1.bf16.msra.mxu0 0
      %1040 = vmatprep.subr.bf16.mxu0 0
      %1041 = vmatpush1.bf16.msra.mxu0 0
      %1042 = vmatprep.subr.bf16.mxu0 0
      %1043 = vmatpush1.bf16.msra.mxu0 0
      %1044 = vmatprep.subr.bf16.mxu0 0
      %1045 = vmatpush1.bf16.msra.mxu0 0
      %1046 = vmatprep.subr.bf16.mxu0 0
      %1047 = vmatpush1.bf16.msra.mxu0 0
      %1048 = vmatprep.subr.bf16.mxu0 0
      %1049 = vmatpush1.bf16.msra.mxu0 0
      %1050 = vmatprep.subr.bf16.mxu0 0
      %1051 = vmatpush1.bf16.msra.mxu0 0
      %1052 = vmatprep.mubr.bf16.mxu0 0
      %1053 = vmatmul.mubr.bf16.gmra.mrb[0].mxu0 %v966
      %v1054 = vpop.f32.mrb[0].mxu0
      %v1055 = vadd.f32 0.0, %v1054
      %v1056 = vpop.f32.mrb[0].mxu0
      %v1057 = vpop.f32.mrb[0].mxu0
      %v1058 = vadd.f32 0.0, %v1057
      %v1059 = vpop.f32.mrb[0].mxu0
      %1060 = vdwg.mxu0
      %v1061 = vadd.f32 %v942, %v1012
      %v1062 = vadd.f32 %v943, %v1014
      %v1063 = vadd.f32 %v944, %v1055
      %v1064 = vadd.f32 %v945, %v1016
      %v1065 = vadd.f32 %v946, %v1018
      %v1066 = vadd.f32 %v947, %v1058
      %s1067 = scalar_lea.vmem %s1, 56
      %v1068 = vld [vmem:[%s1067] sm:$0xf]
      %v1069 = vld [vmem:[%s1067 + $0x4] sm:$0xf]
      %v1072 = vunpack.c.l.b16 %v1068
      %v1073 = vunpack.c.l.b16 %v1069
      %v1074 = vpack.c.b16 %v1073, %v1072
      %1075 = vrot.lane.b32.xlu0 %v261, 91
      %v1076 = vpop.permute.xlu0 %1075
      %1077 = vrot.lane.b32.xlu0 %v262, 91
      %v1078 = vpop.permute.xlu0 %1077
      %1079 = vrot.lane.b32.xlu0 %v263, 91
      %v1080 = vpop.permute.xlu0 %1079
      %vm1081 = vcmask 744448
      %v1082 = vsel %vm1081, %v1076, %v1078
      %v1083 = vsel %vm1081, %v1078, %v1080
      %v1085 = vsel %vm273, %v1074, 0
      %v1088 = vsel %vm277, %v1082, 0
      %v1091 = vsel %vm277, %v1083, 0
      %v1094 = vsel %vm277, %v1080, 0
      %1096 = vmatprep.subr.bf16.mxu0 %v1091
      %1097 = vmatpush1.bf16.msra.mxu0 %v1088
      %1098 = vmatprep.subr.bf16.mxu0 0
      %1099 = vmatpush1.bf16.msra.mxu0 0
      %1100 = vmatprep.subr.bf16.mxu0 0
      %1101 = vmatpush1.bf16.msra.mxu0 0
      %1102 = vmatprep.subr.bf16.mxu0 0
      %1103 = vmatpush1.bf16.msra.mxu0 0
      %1104 = vmatprep.subr.bf16.mxu0 0
      %1105 = vmatpush1.bf16.msra.mxu0 0
      %1106 = vmatprep.subr.bf16.mxu0 0
      %1107 = vmatpush1.bf16.msra.mxu0 0
      %1108 = vmatprep.subr.bf16.mxu0 0
      %1109 = vmatpush1.bf16.msra.mxu0 0
      %1110 = vmatprep.subr.bf16.mxu0 0
      %1111 = vmatpush1.bf16.msra.mxu0 0
      %1112 = vmatprep.subr.bf16.mxu0 0
      %1113 = vmatpush1.bf16.msra.mxu0 0
      %1114 = vmatprep.subr.bf16.mxu0 0
      %1115 = vmatpush1.bf16.msra.mxu0 0
      %1116 = vmatprep.subr.bf16.mxu0 0
      %1117 = vmatpush1.bf16.msra.mxu0 0
      %1118 = vmatprep.subr.bf16.mxu0 0
      %1119 = vmatpush1.bf16.msra.mxu0 0
      %1120 = vmatprep.subr.bf16.mxu0 0
      %1121 = vmatpush1.bf16.msra.mxu0 0
      %1122 = vmatprep.subr.bf16.mxu0 0
      %1123 = vmatpush1.bf16.msra.mxu0 0
      %1124 = vmatprep.subr.bf16.mxu0 0
      %1125 = vmatpush1.bf16.msra.mxu0 0
      %1126 = vmatprep.subr.bf16.mxu0 0
      %1127 = vmatpush1.bf16.msra.mxu0 0
      %1128 = vmatprep.mubr.bf16.mxu0 0
      %1129 = vmatmul.mubr.bf16.gmra.mrb[0].mxu0 %v1085
      %v1130 = vpop.f32.mrb[0].mxu0
      %v1131 = vadd.f32 0.0, %v1130
      %v1132 = vpop.f32.mrb[0].mxu0
      %v1133 = vadd.f32 0.0, %v1132
      %v1134 = vpop.f32.mrb[0].mxu0
      %v1135 = vadd.f32 0.0, %v1134
      %v1136 = vpop.f32.mrb[0].mxu0
      %v1137 = vadd.f32 0.0, %v1136
      %1138 = vdwg.mxu0
      %1139 = vmatprep.subr.bf16.mxu0 0
      %1140 = vmatpush1.bf16.msra.mxu0 %v1094
      %1141 = vmatprep.subr.bf16.mxu0 0
      %1142 = vmatpush1.bf16.msra.mxu0 0
      %1143 = vmatprep.subr.bf16.mxu0 0
      %1144 = vmatpush1.bf16.msra.mxu0 0
      %1145 = vmatprep.subr.bf16.mxu0 0
      %1146 = vmatpush1.bf16.msra.mxu0 0
      %1147 = vmatprep.subr.bf16.mxu0 0
      %1148 = vmatpush1.bf16.msra.mxu0 0
      %1149 = vmatprep.subr.bf16.mxu0 0
      %1150 = vmatpush1.bf16.msra.mxu0 0
      %1151 = vmatprep.subr.bf16.mxu0 0
      %1152 = vmatpush1.bf16.msra.mxu0 0
      %1153 = vmatprep.subr.bf16.mxu0 0
      %1154 = vmatpush1.bf16.msra.mxu0 0
      %1155 = vmatprep.subr.bf16.mxu0 0
      %1156 = vmatpush1.bf16.msra.mxu0 0
      %1157 = vmatprep.subr.bf16.mxu0 0
      %1158 = vmatpush1.bf16.msra.mxu0 0
      %1159 = vmatprep.subr.bf16.mxu0 0
      %1160 = vmatpush1.bf16.msra.mxu0 0
      %1161 = vmatprep.subr.bf16.mxu0 0
      %1162 = vmatpush1.bf16.msra.mxu0 0
      %1163 = vmatprep.subr.bf16.mxu0 0
      %1164 = vmatpush1.bf16.msra.mxu0 0
      %1165 = vmatprep.subr.bf16.mxu0 0
      %1166 = vmatpush1.bf16.msra.mxu0 0
      %1167 = vmatprep.subr.bf16.mxu0 0
      %1168 = vmatpush1.bf16.msra.mxu0 0
      %1169 = vmatprep.subr.bf16.mxu0 0
      %1170 = vmatpush1.bf16.msra.mxu0 0
      %1171 = vmatprep.mubr.bf16.mxu0 0
      %1172 = vmatmul.mubr.bf16.gmra.mrb[0].mxu0 %v1085
      %v1173 = vpop.f32.mrb[0].mxu0
      %v1174 = vadd.f32 0.0, %v1173
      %v1175 = vpop.f32.mrb[0].mxu0
      %v1176 = vpop.f32.mrb[0].mxu0
      %v1177 = vadd.f32 0.0, %v1176
      %v1178 = vpop.f32.mrb[0].mxu0
      %1179 = vdwg.mxu0
      %v1180 = vadd.f32 %v1061, %v1131
      %v1181 = vadd.f32 %v1062, %v1133
      %v1182 = vadd.f32 %v1063, %v1174
      %v1183 = vadd.f32 %v1064, %v1135
      %v1184 = vadd.f32 %v1065, %v1137
      %v1185 = vadd.f32 %v1066, %v1177
      %s1186 = scalar_lea.vmem %s1, 64
      %v1187 = vld [vmem:[%s1186] sm:$0xf]
      %v1188 = vld [vmem:[%s1186 + $0x4] sm:$0xf]
      %v1191 = vunpack.c.l.b16 %v1187
      %v1192 = vunpack.c.l.b16 %v1188
      %v1193 = vpack.c.b16 %v1192, %v1191
      %1194 = vrot.lane.b32.xlu0 %v261, 90
      %v1195 = vpop.permute.xlu0 %1194
      %1196 = vrot.lane.b32.xlu0 %v262, 90
      %v1197 = vpop.permute.xlu0 %1196
      %1198 = vrot.lane.b32.xlu0 %v263, 90
      %v1199 = vpop.permute.xlu0 %1198
      %vm1200 = vcmask 736256
      %v1201 = vsel %vm1200, %v1195, %v1197
      %v1202 = vsel %vm1200, %v1197, %v1199
      %v1204 = vsel %vm273, %v1193, 0
      %v1207 = vsel %vm277, %v1201, 0
      %v1210 = vsel %vm277, %v1202, 0
      %v1213 = vsel %vm277, %v1199, 0
      %1215 = vmatprep.subr.bf16.mxu0 %v1210
      %1216 = vmatpush1.bf16.msra.mxu0 %v1207
      %1217 = vmatprep.subr.bf16.mxu0 0
      %1218 = vmatpush1.bf16.msra.mxu0 0
      %1219 = vmatprep.subr.bf16.mxu0 0
      %1220 = vmatpush1.bf16.msra.mxu0 0
      %1221 = vmatprep.subr.bf16.mxu0 0
      %1222 = vmatpush1.bf16.msra.mxu0 0
      %1223 = vmatprep.subr.bf16.mxu0 0
      %1224 = vmatpush1.bf16.msra.mxu0 0
      %1225 = vmatprep.subr.bf16.mxu0 0
      %1226 = vmatpush1.bf16.msra.mxu0 0
      %1227 = vmatprep.subr.bf16.mxu0 0
      %1228 = vmatpush1.bf16.msra.mxu0 0
      %1229 = vmatprep.subr.bf16.mxu0 0
      %1230 = vmatpush1.bf16.msra.mxu0 0
      %1231 = vmatprep.subr.bf16.mxu0 0
      %1232 = vmatpush1.bf16.msra.mxu0 0
      %1233 = vmatprep.subr.bf16.mxu0 0
      %1234 = vmatpush1.bf16.msra.mxu0 0
      %1235 = vmatprep.subr.bf16.mxu0 0
      %1236 = vmatpush1.bf16.msra.mxu0 0
      %1237 = vmatprep.subr.bf16.mxu0 0
      %1238 = vmatpush1.bf16.msra.mxu0 0
      %1239 = vmatprep.subr.bf16.mxu0 0
      %1240 = vmatpush1.bf16.msra.mxu0 0
      %1241 = vmatprep.subr.bf16.mxu0 0
      %1242 = vmatpush1.bf16.msra.mxu0 0
      %1243 = vmatprep.subr.bf16.mxu0 0
      %1244 = vmatpush1.bf16.msra.mxu0 0
      %1245 = vmatprep.subr.bf16.mxu0 0
      %1246 = vmatpush1.bf16.msra.mxu0 0
      %1247 = vmatprep.mubr.bf16.mxu0 0
      %1248 = vmatmul.mubr.bf16.gmra.mrb[0].mxu0 %v1204
      %v1249 = vpop.f32.mrb[0].mxu0
      %v1250 = vadd.f32 0.0, %v1249
      %v1251 = vpop.f32.mrb[0].mxu0
      %v1252 = vadd.f32 0.0, %v1251
      %v1253 = vpop.f32.mrb[0].mxu0
      %v1254 = vadd.f32 0.0, %v1253
      %v1255 = vpop.f32.mrb[0].mxu0
      %v1256 = vadd.f32 0.0, %v1255
      %1257 = vdwg.mxu0
      %1258 = vmatprep.subr.bf16.mxu0 0
      %1259 = vmatpush1.bf16.msra.mxu0 %v1213
      %1260 = vmatprep.subr.bf16.mxu0 0
      %1261 = vmatpush1.bf16.msra.mxu0 0
      %1262 = vmatprep.subr.bf16.mxu0 0
      %1263 = vmatpush1.bf16.msra.mxu0 0
      %1264 = vmatprep.subr.bf16.mxu0 0
      %1265 = vmatpush1.bf16.msra.mxu0 0
      %1266 = vmatprep.subr.bf16.mxu0 0
      %1267 = vmatpush1.bf16.msra.mxu0 0
      %1268 = vmatprep.subr.bf16.mxu0 0
      %1269 = vmatpush1.bf16.msra.mxu0 0
      %1270 = vmatprep.subr.bf16.mxu0 0
      %1271 = vmatpush1.bf16.msra.mxu0 0
      %1272 = vmatprep.subr.bf16.mxu0 0
      %1273 = vmatpush1.bf16.msra.mxu0 0
      %1274 = vmatprep.subr.bf16.mxu0 0
      %1275 = vmatpush1.bf16.msra.mxu0 0
      %1276 = vmatprep.subr.bf16.mxu0 0
      %1277 = vmatpush1.bf16.msra.mxu0 0
      %1278 = vmatprep.subr.bf16.mxu0 0
      %1279 = vmatpush1.bf16.msra.mxu0 0
      %1280 = vmatprep.subr.bf16.mxu0 0
      %1281 = vmatpush1.bf16.msra.mxu0 0
      %1282 = vmatprep.subr.bf16.mxu0 0
      %1283 = vmatpush1.bf16.msra.mxu0 0
      %1284 = vmatprep.subr.bf16.mxu0 0
      %1285 = vmatpush1.bf16.msra.mxu0 0
      %1286 = vmatprep.subr.bf16.mxu0 0
      %1287 = vmatpush1.bf16.msra.mxu0 0
      %1288 = vmatprep.subr.bf16.mxu0 0
      %1289 = vmatpush1.bf16.msra.mxu0 0
      %1290 = vmatprep.mubr.bf16.mxu0 0
      %1291 = vmatmul.mubr.bf16.gmra.mrb[0].mxu0 %v1204
      %v1292 = vpop.f32.mrb[0].mxu0
      %v1293 = vadd.f32 0.0, %v1292
      %v1294 = vpop.f32.mrb[0].mxu0
      %v1295 = vpop.f32.mrb[0].mxu0
      %v1296 = vadd.f32 0.0, %v1295
      %v1297 = vpop.f32.mrb[0].mxu0
      %1298 = vdwg.mxu0
      %v1299 = vadd.f32 %v1180, %v1250
      %v1300 = vadd.f32 %v1181, %v1252
      %v1301 = vadd.f32 %v1182, %v1293
      %v1302 = vadd.f32 %v1183, %v1254
      %v1303 = vadd.f32 %v1184, %v1256
      %v1304 = vadd.f32 %v1185, %v1296
      %v1305 = vxor.u32 %v1302, 2147483648
      %v1306 = vxor.u32 %v1303, 2147483648
      %v1307 = vxor.u32 %v1304, 2147483648
      %v1308 = vmul.f32 %v1305, 1.442695
      %v1309 = vpow.pop %v1308
      %v1310 = vmul.f32 %v1306, 1.442695
      %v1311 = vpow.pop %v1310
      %v1312 = vmul.f32 %v1307, 1.442695
      %v1313 = vpow.pop %v1312
      %v1314 = vadd.f32 %v1309, 1.0
      %v1315 = vadd.f32 %v1311, 1.0
      %v1316 = vadd.f32 %v1313, 1.0
      %v1317 = vrcp.pop %v1314
      %v1318 = vmul.f32 1.0, %v1317
      %v1319 = vrcp.pop %v1315
      %v1320 = vmul.f32 1.0, %v1319
      %v1321 = vrcp.pop %v1316
      %v1322 = vmul.f32 1.0, %v1321
      %v1323 = vmul.f32 %v1299, %v1318
      %v1324 = vmul.f32 %v1300, %v1320
      %v1325 = vmul.f32 %v1301, %v1322
      %v1326 = vpack.c.bf16 %v1323, %v1323
      %v1327 = vpack.c.bf16 %v1324, %v1324
      %v1328 = vpack.c.bf16 %v1325, %v1325
      %v1332 = vunpack.c.l.b16 %v1326
      %v1333 = vunpack.c.l.b16 %v1327
      %v1334 = vunpack.c.l.b16 %v1328
      %v1335 = vpack.c.b16 %v1333, %v1332
      %v1336 = vpack.c.b16 %v1334, %v1334
      %1339 = vst [vmem:[%s177] sm:$0xff] %v1335
      %vm1340 = vcmask 257024
      %1341 = vst.msk [vmem:[%s177 + $0x8] sm:$0xf] %vm1340, %v1336
      %v1342 = vmul.f32 %v1323, %v241
      %v1343 = vmul.f32 %v1324, %v242
      %v1344 = vmul.f32 %v1325, %v243
      %v1345 = vadd.f32 %v1342, %v1343
      %vm1346 = vcmask 261120
      %v1347 = vsel %vm1346, %v1344, 0.0
      %v1348 = vadd.f32 %v1345, %v1347
      %1349 = vadd.xlane.f32.xlu0 %v1348
      %v1350 = vpop.xlane.xlu0 %1349
      %v1351 = vadd.f32 %v1350, 0.0
      %v1352 = vmul.f32 %v1342, %v1323
      %v1353 = vmul.f32 %v1343, %v1324
      %v1354 = vmul.f32 %v1344, %v1325
      %v1355 = vadd.f32 %v1352, %v1353
      %v1356 = vsel %vm1346, %v1354, 0.0
      %v1357 = vadd.f32 %v1355, %v1356
      %1358 = vadd.xlane.f32.xlu0 %v1357
      %v1359 = vpop.xlane.xlu0 %1358
      %v1360 = vadd.f32 %v1359, 0.0
      %vm1361 = vcmask 7168
      %v1362 = vsel %vm1361, %v1351, %v1360
      %vm1363 = vcmask 15360
      %1364 = vst.msk [vmem:[%s181] sm:$0xff] %vm1363, %v1362
      %p1365 = scmp.lt.s32.totalorder %s15, 1
      %s1366 = scalar_select %p1365, %s15, 1
      %s1367 = smul.addr %s1366, 3
      %s1368 = smul.addr %s1367, 4
      %s1369 = scalar_lea.vmem %s2, %s1368
      %p1370 = scmp.lt.s32.totalorder %s15, 1
      %s1371 = scalar_select %p1370, %s15, 1
      %s1372 = smul.addr %s1371, 8
      %s1373 = scalar_lea.vmem %s3, %s1372
      // Predicated region
      $region29: #{gcu_forward.1} parent=27 // pred_check
        %p1374 = pneg %p80
      $region30: #{gcu_forward.1} parent=27 // pred_check_branch
        %1376 = sbr.rel (%p1374) target = $region32
      $region31: #{gcu_forward.1} parent=27 // pred_region
        _
      $region32: #{gcu_forward.1} parent=27 // pred_fallthru
        _
      // Predicated region
      $region33: #{gcu_forward.1} parent=27 // pred_check
        %p1377 = pneg %p106
      $region34: #{gcu_forward.1} parent=27 // pred_check_branch
        %1379 = sbr.rel (%p1377) target = $region36
      $region35: #{gcu_forward.1} parent=27 // pred_region
        _
      $region36: #{gcu_forward.1} parent=27 // pred_fallthru
        _
    $region28: #{gcu_forward.1} parent=5 // pred_fallthru
      _
    %p1380 = scmp.le.s32.totalorder 2, %s10
    // Predicated region
    $region37: #{gcu_forward.1} parent=5 // pred_check
      %p1381 = pneg %p1380
    $region38: #{gcu_forward.1} parent=5 // pred_check_branch
      %1383 = sbr.rel (%p1381) target = $region40
    $region39: #{gcu_forward.1} parent=5 // pred_region
      %s1384 = ssub.s32 %s10, 2
      // Predicated region
      $region41: #{gcu_forward.1} parent=39 // pred_check
        %p1385 = pneg %p86
      $region42: #{gcu_forward.1} parent=39 // pred_check_branch
        %1387 = sbr.rel (%p1385) target = $region44
      $region43: #{gcu_forward.1} parent=39 // pred_region
        %p1388 = scmp.lt.s32.totalorder %s16, 1
        %s1389 = scalar_select %p1388, %s16, 1
        %s1390 = smul.addr %s1389, 3
        %s1391 = smul.addr %s1390, 4
        %s1392 = scalar_lea.vmem %s2, %s1391
      $region44: #{gcu_forward.1} parent=39 // pred_fallthru
        _
      // Predicated region
      $region45: #{gcu_forward.1} parent=39 // pred_check
        %p1393 = pneg %p112
      $region46: #{gcu_forward.1} parent=39 // pred_check_branch
        %1395 = sbr.rel (%p1393) target = $region48
      $region47: #{gcu_forward.1} parent=39 // pred_region
        %p1396 = scmp.lt.s32.totalorder %s16, 1
        %s1397 = scalar_select %p1396, %s16, 1
        %s1398 = smul.addr %s1397, 8
        %s1399 = scalar_lea.vmem %s3, %s1398
      $region48: #{gcu_forward.1} parent=39 // pred_fallthru
        _
    $region40: #{gcu_forward.1} parent=5 // pred_fallthru
      _
  $region6: #{gcu_forward.1} parent=0 // loop_footer
    %s14 = sadd.s32 1, %s10
  $region7: #{gcu_forward.1} parent=0 // loop_footer_branch
    %9 = sbr.rel target = $region3
  $region8: #{gcu_forward.1} parent=0 // loop_exit
    _

</llo_original>
